<compile_context>
chip_gen: v7x
topology: tpu7x:2x2x1
jax: 0.10.0
libtpu: 0.0.40
codegen_flags: <defaults>
</compile_context>

<pallas_src>
import functools

import jax
import jax.numpy as jnp
from jax.experimental import pallas as pl
from jax.experimental.pallas import tpu as pltpu


def proto_kernel(sup_mask_ref, qry_mask_ref,          # SMEM (scalar prefetch) int32
                 rel_feat_ref, avg_ref,                # VMEM (N_pad,2H), (N_pad,NK)
                 sup_pool_ref, sup_hid_hbm,            # VMEM (NK,H), HBM (NK,S,H)
                 qry_pool_ref, qry_hid_hbm,            # VMEM (TQ,H), HBM (Q,S,H)
                 w_pro_ref, w_rel_ref, b_gate_ref,     # VMEM (2H,2H),(2H,2H),(1,2H)
                 logits_ref,                           # out  (TQ, N_pad)
                 sf, qf,                               # VMEM feature slabs
                 sup_sem, qry_sem,                     # counting DMA semaphores
                 *, q_total):
    NK, H = sup_pool_ref.shape
    TQ = qry_pool_ref.shape[0]
    H2 = 2 * H
    eps = 1e-6
    q_base = pl.program_id(0) * TQ

    # ---- 1. start [MASK]-row gathers, landing directly into sf/qf[:, H:2H] --
    def sup_copy(r):
        return pltpu.make_async_copy(
            sup_hid_hbm.at[r, pl.ds(sup_mask_ref[r], 1), :],
            sf.at[pl.ds(r, 1), pl.ds(H, H)],
            sup_sem.at[0])

    def qry_copy(r):
        row = jnp.minimum(q_base + r, q_total - 1)      # clamp padded rows
        return pltpu.make_async_copy(
            qry_hid_hbm.at[row, pl.ds(qry_mask_ref[row], 1), :],
            qf.at[pl.ds(r, 1), pl.ds(H, H)],
            qry_sem.at[0])

    @pl.loop(0, NK)
    def _(r):
        sup_copy(r).start()

    @pl.loop(0, TQ)
    def _(r):
        qry_copy(r).start()

    # wait descriptors (size + semaphore only); built once, reused in the loops
    sup_wait = pltpu.make_async_copy(
        sup_hid_hbm.at[0, pl.ds(0, 1), :], sf.at[pl.ds(0, 1), pl.ds(H, H)],
        sup_sem.at[0])
    qry_wait = pltpu.make_async_copy(
        qry_hid_hbm.at[0, pl.ds(0, 1), :], qf.at[pl.ds(0, 1), pl.ds(H, H)],
        qry_sem.at[0])

    # ---- 2. pooler halves of the slabs (overlaps the gather DMAs) -----------
    sf[:, 0:H] = sup_pool_ref[...]
    qf[:, 0:H] = qry_pool_ref[...]

    # ---- 3. prototypes -------------------------------------------------------
    @pl.loop(0, NK)
    def _(r):
        sup_wait.wait()

    # K-shot mean as an MXU matmul with the zero-padded averaging matrix.
    support = jnp.dot(avg_ref[...], sf[...],
                      preferred_element_type=jnp.float32)            # (N_pad, 2H)
    relation = rel_feat_ref[...]                                     # (N_pad, 2H)
    gate = jax.nn.sigmoid(
        jnp.dot(support, w_pro_ref[...], preferred_element_type=jnp.float32)
        + jnp.dot(relation, w_rel_ref[...], preferred_element_type=jnp.float32)
        + b_gate_ref[...])
    # padded rows (>= N): support == relation == 0  ->  proto row is exactly 0.
    proto = gate * support + (1.0 - gate) * relation                 # (N_pad, 2H)

    # ---- 4. query features ---------------------------------------------------
    @pl.loop(0, TQ)
    def _(r):
        qry_wait.wait()
    query = qf[...]                                                  # (TQ, 2H)

    # ---- 5. logits = -||query - proto + eps||_2 via norm expansion (MXU) -----
    #   d2 = (|q|^2 + 2 eps sum q) + (|p|^2 - 2 eps sum p) - 2 q.p + 2H eps^2
    cn = (((1,), (1,)), ((), ()))                                    # contract last dims
    ones_row = jnp.ones((1, H2), jnp.float32)
    cross = jax.lax.dot_general(query, proto, cn,
                                preferred_element_type=jnp.float32)           # (TQ, N_pad)
    q_terms = jax.lax.dot_general(query * query + (2.0 * eps) * query, ones_row,
                                  cn, preferred_element_type=jnp.float32)     # (TQ, 1)
    p_terms = jax.lax.dot_general(ones_row, proto * proto - (2.0 * eps) * proto,
                                  cn, preferred_element_type=jnp.float32)     # (1, N_pad)
    d2 = q_terms + p_terms - 2.0 * cross + (H2 * eps * eps)
    logits_ref[...] = -jnp.sqrt(jnp.maximum(d2, 0.0))


def _round_up(x, m):
    return (x + m - 1) // m * m


@jax.jit
def proto_forward(rel_pool, rel_hid, sup_pool, sup_hid, sup_mask,
                  qry_pool, qry_hid, qry_mask, w_pro_t, b_pro, w_rel_t, b_rel):
    N, S, H = rel_hid.shape
    NK = sup_hid.shape[0]
    Q = qry_hid.shape[0]
    H2 = 2 * H
    if NK % N != 0:
        raise ValueError("support rows must be laid out class-major as N*K")
    if H % 128 != 0:
        raise ValueError("hidden size must be a multiple of 128 for lane-aligned "
                         "direct-DMA landing (BERT-base 768 satisfies this)")
    K = NK // N

    N_pad = _round_up(N, 128)             # lane-dense logits / zero-padded protos
    TQ = min(128, _round_up(Q, 8))        # query-row block (parallel grid axis)
    Qp = _round_up(Q, TQ)
    nq = Qp // TQ

    # relation features: seq-mean + concat are HBM-roofline reductions -> XLA.
    relation = jnp.concatenate(
        [rel_pool, jnp.mean(rel_hid, axis=1)], axis=-1).astype(jnp.float32)
    relation_pad = jnp.zeros((N_pad, H2), jnp.float32).at[:N, :].set(relation)

    # K-shot averaging matrix: row n has 1/K over columns n*K .. n*K+K-1,
    # zero rows beyond N (so padded prototypes come out exactly zero).
    avg = (jnp.arange(N_pad)[:, None] == (jnp.arange(NK)[None, :] // K)
           ).astype(jnp.float32) * (1.0 / K)

    b_gate = (b_pro + b_rel).reshape(1, H2).astype(jnp.float32)

    qry_pool_pad = qry_pool
    if Qp != Q:
        qry_pool_pad = jnp.zeros((Qp, H), qry_pool.dtype).at[:Q, :].set(qry_pool)

    # explicit scoped-VMEM budget (resident inputs + slabs + pipelined blocks)
    need = 4 * (2 * (TQ * H + TQ * N_pad)
                + N_pad * H2 + N_pad * NK + NK * H
                + 2 * H2 * H2 + H2
                + NK * H2 + TQ * H2)
    vmem_limit = int(min(96 * 2**20, max(32 * 2**20, 2 * need)))

    flops = (2 * nq * (N_pad * NK * H2 + 2 * N_pad * H2 * H2 + N_pad * H2)
             + 2 * Qp * (N_pad * H2 + H2))
    bytes_accessed = 4 * (2 * NK * H + 2 * Qp * H + Qp * N_pad
                          + nq * (N_pad * H2 + N_pad * NK + NK * H
                                  + 2 * H2 * H2 + H2))
    cost = pl.CostEstimate(flops=int(flops),
                           transcendentals=int(nq * N_pad * H2 + Qp * N_pad),
                           bytes_accessed=int(bytes_accessed))

    grid_spec = pltpu.PrefetchScalarGridSpec(
        num_scalar_prefetch=2,                       # sup_mask, qry_mask -> SMEM
        grid=(nq,),
        in_specs=[
            pl.BlockSpec((N_pad, H2), lambda qi, sm, qm: (0, 0)),   # relation
            pl.BlockSpec((N_pad, NK), lambda qi, sm, qm: (0, 0)),   # avg matrix
            pl.BlockSpec((NK, H), lambda qi, sm, qm: (0, 0)),       # sup_pool
            pl.BlockSpec(memory_space=pl.ANY),                      # sup_hid (HBM)
            pl.BlockSpec((TQ, H), lambda qi, sm, qm: (qi, 0)),      # qry_pool blk
            pl.BlockSpec(memory_space=pl.ANY),                      # qry_hid (HBM)
            pl.BlockSpec((H2, H2), lambda qi, sm, qm: (0, 0)),      # W_pro^T
            pl.BlockSpec((H2, H2), lambda qi, sm, qm: (0, 0)),      # W_rel^T
            pl.BlockSpec((1, H2), lambda qi, sm, qm: (0, 0)),       # b_pro+b_rel
        ],
        out_specs=pl.BlockSpec((TQ, N_pad), lambda qi, sm, qm: (qi, 0)),
        scratch_shapes=[
            pltpu.VMEM((NK, H2), jnp.float32),       # sf: support feature slab
            pltpu.VMEM((TQ, H2), jnp.float32),       # qf: query feature slab
            pltpu.SemaphoreType.DMA((1,)),           # support gather (counting)
            pltpu.SemaphoreType.DMA((1,)),           # query gather (counting)
        ],
    )

    logits_pad = pl.pallas_call(
        functools.partial(proto_kernel, q_total=Q),
        out_shape=jax.ShapeDtypeStruct((Qp, N_pad), jnp.float32),
        grid_spec=grid_spec,
        compiler_params=pltpu.CompilerParams(
            dimension_semantics=("parallel",),
            vmem_limit_bytes=vmem_limit),
        cost_estimate=cost,
    )(sup_mask.astype(jnp.int32).reshape(NK),
      qry_mask.astype(jnp.int32).reshape(Q),
      relation_pad, avg, sup_pool, sup_hid, qry_pool_pad, qry_hid,
      w_pro_t, w_rel_t, b_gate)

    logits = logits_pad[:Q, :N]
    # argmax over N ways is trivial -> XLA (avoids a narrow int store in-kernel)
    preds = jnp.argmax(logits, axis=-1).astype(jnp.int32)
    return logits, preds


def proto_forward_ref(rel_pool, rel_hid, sup_pool, sup_hid, sup_mask,
                      qry_pool, qry_hid, qry_mask, w_pro_t, b_pro, w_rel_t, b_rel):
    """Plain-JAX reference (PyTorch-faithful diff + eps form)."""
    N, S, H = rel_hid.shape
    NK = sup_hid.shape[0]
    Q = qry_hid.shape[0]
    K = NK // N
    relation = jnp.concatenate([rel_pool, jnp.mean(rel_hid, axis=1)], axis=-1)
    sup_local = sup_hid[jnp.arange(NK), sup_mask.reshape(NK)]
    sentence = jnp.concatenate([sup_pool, sup_local], axis=-1)
    support = jnp.mean(sentence.reshape(N, K, 2 * H), axis=1)
    gate = jax.nn.sigmoid(support @ w_pro_t + b_pro + relation @ w_rel_t + b_rel)
    support = gate * support + (1.0 - gate) * relation
    qry_local = qry_hid[jnp.arange(Q), qry_mask.reshape(Q)]
    query = jnp.concatenate([qry_pool, qry_local], axis=-1)
    diff = query[:, None, :] - support[None, :, :] + 1e-6
    logits = -jnp.sqrt(jnp.sum(diff * diff, axis=-1))
    preds = jnp.argmax(logits, axis=-1).astype(jnp.int32)
    return logits, preds


if __name__ == "__main__":
    # Small episode: N_way=4, K_shot=2, Q_num=2, Q_na_rate=1 -> 16 query samples
    N_way, K_shot, Q_num, Q_na_rate = 4, 2, 2, 1
    Q_total = Q_num + Q_num * Q_na_rate
    N_query = N_way * Q_total                       # 16
    S, H = 8, 128                                   # seq_len, hidden_size (2H = 256)
    NK = N_way * K_shot
    H2 = 2 * H

    key = jax.random.PRNGKey(0)
    ks = jax.random.split(key, 12)

    rel_pool = jax.random.normal(ks[0], (N_way, H), jnp.float32) * 0.1
    rel_hid  = jax.random.normal(ks[1], (N_way, S, H), jnp.float32) * 0.1
    sup_pool = jax.random.normal(ks[2], (NK, H), jnp.float32) * 0.1
    sup_hid  = jax.random.normal(ks[3], (NK, S, H), jnp.float32) * 0.1
    sup_mask = jax.random.randint(ks[4], (NK,), 0, S, jnp.int32)
    qry_pool = jax.random.normal(ks[5], (N_query, H), jnp.float32) * 0.1
    qry_hid  = jax.random.normal(ks[6], (N_query, S, H), jnp.float32) * 0.1
    qry_mask = jax.random.randint(ks[7], (N_query,), 0, S, jnp.int32)

    # GateControl(hidden_size*2, bias=True): two Linear(2H, 2H); weights
    # pre-transposed so y = x @ W_T + b.
    w_pro_t = jax.random.normal(ks[8], (H2, H2), jnp.float32) * 0.02
    b_pro   = jax.random.normal(ks[9], (1, H2), jnp.float32) * 0.02
    w_rel_t = jax.random.normal(ks[10], (H2, H2), jnp.float32) * 0.02
    b_rel   = jax.random.normal(ks[11], (1, H2), jnp.float32) * 0.02

    args = (rel_pool, rel_hid, sup_pool, sup_hid, sup_mask,
            qry_pool, qry_hid, qry_mask, w_pro_t, b_pro, w_rel_t, b_rel)

    logits, preds = jax.block_until_ready(proto_forward(*args))
    ref_logits, ref_preds = proto_forward_ref(*args)

    # Norm-expansion distance differs from the diff form only at f32 rounding.
    assert jnp.allclose(logits, ref_logits, atol=1e-4, rtol=1e-4), (
        float(jnp.max(jnp.abs(logits - ref_logits))))
    assert jnp.all(preds == ref_preds)
    print("KERNEL_OK")
</pallas_src>

<mosaic_0001>
module attributes {stable_mosaic.version = 11 : i64} {
  func.func @proto_kernel(%arg0: i32, %arg1: memref<8xi32, #tpu.memory_space<smem>>, %arg2: memref<16xi32, #tpu.memory_space<smem>>, %arg3: memref<128x256xf32, #tpu.memory_space<vmem>>, %arg4: memref<128x8xf32, #tpu.memory_space<vmem>>, %arg5: memref<8x128xf32, #tpu.memory_space<vmem>>, %arg6: memref<8x8x128xf32, #tpu.memory_space<any>>, %arg7: memref<16x128xf32, #tpu.memory_space<vmem>>, %arg8: memref<16x8x128xf32, #tpu.memory_space<any>>, %arg9: memref<256x256xf32, #tpu.memory_space<vmem>>, %arg10: memref<256x256xf32, #tpu.memory_space<vmem>>, %arg11: memref<1x256xf32, #tpu.memory_space<vmem>>, %arg12: memref<16x128xf32, #tpu.memory_space<vmem>>, %arg13: memref<8x256xf32, #tpu.memory_space<vmem>>, %arg14: memref<16x256xf32, #tpu.memory_space<vmem>>, %arg15: memref<1x!tpu.dma_semaphore, #tpu.memory_space<semaphore_mem>>, %arg16: memref<1x!tpu.dma_semaphore, #tpu.memory_space<semaphore_mem>>) attributes {dimension_semantics = [#tpu.dimension_semantics<parallel>], iteration_bounds = array<i64: 1>, scalar_prefetch = 2 : i64, scratch_operands = 4 : i64, tpu.core_type = #tpu.core_type<tc>, window_params = [{pipeline_mode = #tpu.pipeline_mode<synchronous>, transform_indices = @transform_0, window_bounds = array<i64: 128, 256>}, {pipeline_mode = #tpu.pipeline_mode<synchronous>, transform_indices = @transform_1, window_bounds = array<i64: 128, 8>}, {pipeline_mode = #tpu.pipeline_mode<synchronous>, transform_indices = @transform_2, window_bounds = array<i64: 8, 128>}, {}, {transform_indices = @transform_4, window_bounds = array<i64: 16, 128>}, {}, {pipeline_mode = #tpu.pipeline_mode<synchronous>, transform_indices = @transform_6, window_bounds = array<i64: 256, 256>}, {pipeline_mode = #tpu.pipeline_mode<synchronous>, transform_indices = @transform_7, window_bounds = array<i64: 256, 256>}, {pipeline_mode = #tpu.pipeline_mode<synchronous>, transform_indices = @transform_8, window_bounds = array<i64: 1, 256>}, {transform_indices = @transform_9, window_bounds = array<i64: 16, 128>}]} {
    %c16_i32 = arith.constant 16 : i32
    %0 = arith.muli %arg0, %c16_i32 : i32
    %c0_i32 = arith.constant 0 : i32
    %c8_i32 = arith.constant 8 : i32
    %1 = arith.addi %c0_i32, %c8_i32 : i32
    %c1_i32 = arith.constant 1 : i32
    scf.for %arg17 = %c0_i32 to %1 step %c1_i32  : i32 {
      %c1_i32_52 = arith.constant 1 : i32
      %58 = arith.muli %arg17, %c1_i32_52 : i32
      %c0_i32_53 = arith.constant 0 : i32
      %59 = arith.addi %c0_i32_53, %58 : i32
      %60 = arith.index_cast %59 : i32 to index
      %61 = memref.load %arg1[%60] : memref<8xi32, #tpu.memory_space<smem>>
      %c0_i32_54 = arith.constant 0 : i32
      %c0_i32_55 = arith.constant 0 : i32
      %62 = tpu.memref_slice %arg6[%59, %61, %c0_i32_55] : memref<8x8x128xf32, #tpu.memory_space<any>> -> memref<1x1x128xf32, #tpu.memory_space<any>>
      %63 = tpu.memref_squeeze %62 : memref<1x1x128xf32, #tpu.memory_space<any>> -> memref<1x128xf32, #tpu.memory_space<any>>
      %c128_i32 = arith.constant 128 : i32
      %64 = tpu.memref_slice %arg13[%59, %c128_i32] : memref<8x256xf32, #tpu.memory_space<vmem>> -> memref<1x128xf32, #tpu.memory_space<vmem>>
      %65 = tpu.memref_slice %arg15[%c0_i32_54] : memref<1x!tpu.dma_semaphore, #tpu.memory_space<semaphore_mem>> -> memref<1x!tpu.dma_semaphore, #tpu.memory_space<semaphore_mem>>
      %66 = tpu.memref_squeeze %65 : memref<1x!tpu.dma_semaphore, #tpu.memory_space<semaphore_mem>> -> memref<!tpu.dma_semaphore, #tpu.memory_space<semaphore_mem>>
      tpu.enqueue_dma source(%63 : memref<1x128xf32, #tpu.memory_space<any>>) target(%64 : memref<1x128xf32, #tpu.memory_space<vmem>>) target_semaphore(%66 : memref<!tpu.dma_semaphore, #tpu.memory_space<semaphore_mem>>)
    }
    %c8_i32_0 = arith.constant 8 : i32
    %c0_i32_1 = arith.constant 0 : i32
    %c16_i32_2 = arith.constant 16 : i32
    %2 = arith.addi %c0_i32_1, %c16_i32_2 : i32
    %c1_i32_3 = arith.constant 1 : i32
    scf.for %arg17 = %c0_i32_1 to %2 step %c1_i32_3  : i32 {
      %c1_i32_52 = arith.constant 1 : i32
      %58 = arith.muli %arg17, %c1_i32_52 : i32
      %c0_i32_53 = arith.constant 0 : i32
      %59 = arith.addi %c0_i32_53, %58 : i32
      %60 = arith.addi %0, %59 : i32
      %c15_i32 = arith.constant 15 : i32
      %61 = arith.minsi %60, %c15_i32 : i32
      %62 = arith.index_cast %61 : i32 to index
      %63 = memref.load %arg2[%62] : memref<16xi32, #tpu.memory_space<smem>>
      %c0_i32_54 = arith.constant 0 : i32
      %c0_i32_55 = arith.constant 0 : i32
      %64 = tpu.memref_slice %arg8[%61, %63, %c0_i32_55] : memref<16x8x128xf32, #tpu.memory_space<any>> -> memref<1x1x128xf32, #tpu.memory_space<any>>
      %65 = tpu.memref_squeeze %64 : memref<1x1x128xf32, #tpu.memory_space<any>> -> memref<1x128xf32, #tpu.memory_space<any>>
      %c128_i32 = arith.constant 128 : i32
      %66 = tpu.memref_slice %arg14[%59, %c128_i32] : memref<16x256xf32, #tpu.memory_space<vmem>> -> memref<1x128xf32, #tpu.memory_space<vmem>>
      %67 = tpu.memref_slice %arg16[%c0_i32_54] : memref<1x!tpu.dma_semaphore, #tpu.memory_space<semaphore_mem>> -> memref<1x!tpu.dma_semaphore, #tpu.memory_space<semaphore_mem>>
      %68 = tpu.memref_squeeze %67 : memref<1x!tpu.dma_semaphore, #tpu.memory_space<semaphore_mem>> -> memref<!tpu.dma_semaphore, #tpu.memory_space<semaphore_mem>>
      tpu.enqueue_dma source(%65 : memref<1x128xf32, #tpu.memory_space<any>>) target(%66 : memref<1x128xf32, #tpu.memory_space<vmem>>) target_semaphore(%68 : memref<!tpu.dma_semaphore, #tpu.memory_space<semaphore_mem>>)
    }
    %c16_i32_4 = arith.constant 16 : i32
    %c0 = arith.constant 0 : index
    %c0_5 = arith.constant 0 : index
    %3 = vector.load %arg5[%c0, %c0_5] : memref<8x128xf32, #tpu.memory_space<vmem>>, vector<8x128xf32>
    %c0_6 = arith.constant 0 : index
    %c0_7 = arith.constant 0 : index
    %4 = vector.load %arg13[%c0_6, %c0_7] : memref<8x256xf32, #tpu.memory_space<vmem>>, vector<8x128xf32>
    tpu.vector_store %arg13[%c0_6, %c0_7], %3 {strides = array<i32>} : memref<8x256xf32, #tpu.memory_space<vmem>>, vector<8x128xf32>,
    %c0_8 = arith.constant 0 : index
    %c0_9 = arith.constant 0 : index
    %5 = vector.load %arg7[%c0_8, %c0_9] : memref<16x128xf32, #tpu.memory_space<vmem>>, vector<16x128xf32>
    %c0_10 = arith.constant 0 : index
    %c0_11 = arith.constant 0 : index
    %6 = vector.load %arg14[%c0_10, %c0_11] : memref<16x256xf32, #tpu.memory_space<vmem>>, vector<16x128xf32>
    tpu.vector_store %arg14[%c0_10, %c0_11], %5 {strides = array<i32>} : memref<16x256xf32, #tpu.memory_space<vmem>>, vector<16x128xf32>,
    %c0_i32_12 = arith.constant 0 : i32
    %c0_i32_13 = arith.constant 0 : i32
    %c0_i32_14 = arith.constant 0 : i32
    %c8_i32_15 = arith.constant 8 : i32
    %7 = arith.addi %c0_i32_14, %c8_i32_15 : i32
    %c1_i32_16 = arith.constant 1 : i32
    scf.for %arg17 = %c0_i32_14 to %7 step %c1_i32_16  : i32 {
      %c0_i32_52 = arith.constant 0 : i32
      %c0_i32_53 = arith.constant 0 : i32
      %58 = tpu.memref_slice %arg6[%c0_i32_12, %c0_i32_52, %c0_i32_53] : memref<8x8x128xf32, #tpu.memory_space<any>> -> memref<1x1x128xf32, #tpu.memory_space<any>>
      %59 = tpu.memref_squeeze %58 : memref<1x1x128xf32, #tpu.memory_space<any>> -> memref<1x128xf32, #tpu.memory_space<any>>
      %c0_i32_54 = arith.constant 0 : i32
      %c128_i32 = arith.constant 128 : i32
      %60 = tpu.memref_slice %arg13[%c0_i32_54, %c128_i32] : memref<8x256xf32, #tpu.memory_space<vmem>> -> memref<1x128xf32, #tpu.memory_space<vmem>>
      %61 = tpu.memref_slice %arg15[%c0_i32_13] : memref<1x!tpu.dma_semaphore, #tpu.memory_space<semaphore_mem>> -> memref<1x!tpu.dma_semaphore, #tpu.memory_space<semaphore_mem>>
      %62 = tpu.memref_squeeze %61 : memref<1x!tpu.dma_semaphore, #tpu.memory_space<semaphore_mem>> -> memref<!tpu.dma_semaphore, #tpu.memory_space<semaphore_mem>>
      tpu.wait_dma2 semaphore(%62 : memref<!tpu.dma_semaphore, #tpu.memory_space<semaphore_mem>>) src(%59 : memref<1x128xf32, #tpu.memory_space<any>>) dst(%60 : memref<1x128xf32, #tpu.memory_space<vmem>>)
    }
    %c0_17 = arith.constant 0 : index
    %c0_18 = arith.constant 0 : index
    %8 = vector.load %arg4[%c0_17, %c0_18] : memref<128x8xf32, #tpu.memory_space<vmem>>, vector<128x8xf32>
    %c0_19 = arith.constant 0 : index
    %c0_20 = arith.constant 0 : index
    %9 = vector.load %arg13[%c0_19, %c0_20] : memref<8x256xf32, #tpu.memory_space<vmem>>, vector<8x256xf32>
    %cst = arith.constant dense<0.000000e+00> : vector<128x256xf32>
    %10 = tpu.matmul %8, %9, %cst {dimension_numbers = #tpu.dot_dimension_numbers<[1], [0], [0], [1], [0, 0, 1, 1], [], []>} : vector<128x8xf32>, vector<8x256xf32>, vector<128x256xf32> -> vector<128x256xf32>
    %c0_21 = arith.constant 0 : index
    %c0_22 = arith.constant 0 : index
    %11 = vector.load %arg3[%c0_21, %c0_22] : memref<128x256xf32, #tpu.memory_space<vmem>>, vector<128x256xf32>
    %c0_23 = arith.constant 0 : index
    %c0_24 = arith.constant 0 : index
    %12 = vector.load %arg9[%c0_23, %c0_24] : memref<256x256xf32, #tpu.memory_space<vmem>>, vector<256x256xf32>
    %cst_25 = arith.constant dense<0.000000e+00> : vector<128x256xf32>
    %13 = tpu.matmul %10, %12, %cst_25 {dimension_numbers = #tpu.dot_dimension_numbers<[1], [0], [0], [1], [0, 0, 1, 1], [], []>} : vector<128x256xf32>, vector<256x256xf32>, vector<128x256xf32> -> vector<128x256xf32>
    %c0_26 = arith.constant 0 : index
    %c0_27 = arith.constant 0 : index
    %14 = vector.load %arg10[%c0_26, %c0_27] : memref<256x256xf32, #tpu.memory_space<vmem>>, vector<256x256xf32>
    %cst_28 = arith.constant dense<0.000000e+00> : vector<128x256xf32>
    %15 = tpu.matmul %11, %14, %cst_28 {dimension_numbers = #tpu.dot_dimension_numbers<[1], [0], [0], [1], [0, 0, 1, 1], [], []>} : vector<128x256xf32>, vector<256x256xf32>, vector<128x256xf32> -> vector<128x256xf32>
    %16 = arith.addf %13, %15 : vector<128x256xf32>
    %c0_29 = arith.constant 0 : index
    %c0_30 = arith.constant 0 : index
    %17 = vector.load %arg11[%c0_29, %c0_30] : memref<1x256xf32, #tpu.memory_space<vmem>>, vector<1x256xf32>
    %18 = vector.broadcast %17 : vector<1x256xf32> to vector<128x256xf32>
    %19 = arith.addf %16, %18 : vector<128x256xf32>
    %20 = arith.negf %19 : vector<128x256xf32>
    %21 = math.exp %20 : vector<128x256xf32>
    %cst_31 = arith.constant 1.000000e+00 : f32
    %22 = vector.broadcast %cst_31 : f32 to vector<128x256xf32>
    %23 = arith.addf %22, %21 : vector<128x256xf32>
    %24 = arith.divf %22, %23 : vector<128x256xf32>
    %25 = arith.mulf %24, %10 : vector<128x256xf32>
    %cst_32 = arith.constant 1.000000e+00 : f32
    %26 = vector.broadcast %cst_32 : f32 to vector<128x256xf32>
    %27 = arith.subf %26, %24 : vector<128x256xf32>
    %28 = arith.mulf %27, %11 : vector<128x256xf32>
    %29 = arith.addf %25, %28 : vector<128x256xf32>
    %c0_i32_33 = arith.constant 0 : i32
    %c0_i32_34 = arith.constant 0 : i32
    %c0_i32_35 = arith.constant 0 : i32
    %c16_i32_36 = arith.constant 16 : i32
    %30 = arith.addi %c0_i32_35, %c16_i32_36 : i32
    %c1_i32_37 = arith.constant 1 : i32
    scf.for %arg17 = %c0_i32_35 to %30 step %c1_i32_37  : i32 {
      %c0_i32_52 = arith.constant 0 : i32
      %c0_i32_53 = arith.constant 0 : i32
      %58 = tpu.memref_slice %arg8[%c0_i32_33, %c0_i32_52, %c0_i32_53] : memref<16x8x128xf32, #tpu.memory_space<any>> -> memref<1x1x128xf32, #tpu.memory_space<any>>
      %59 = tpu.memref_squeeze %58 : memref<1x1x128xf32, #tpu.memory_space<any>> -> memref<1x128xf32, #tpu.memory_space<any>>
      %c0_i32_54 = arith.constant 0 : i32
      %c128_i32 = arith.constant 128 : i32
      %60 = tpu.memref_slice %arg14[%c0_i32_54, %c128_i32] : memref<16x256xf32, #tpu.memory_space<vmem>> -> memref<1x128xf32, #tpu.memory_space<vmem>>
      %61 = tpu.memref_slice %arg16[%c0_i32_34] : memref<1x!tpu.dma_semaphore, #tpu.memory_space<semaphore_mem>> -> memref<1x!tpu.dma_semaphore, #tpu.memory_space<semaphore_mem>>
      %62 = tpu.memref_squeeze %61 : memref<1x!tpu.dma_semaphore, #tpu.memory_space<semaphore_mem>> -> memref<!tpu.dma_semaphore, #tpu.memory_space<semaphore_mem>>
      tpu.wait_dma2 semaphore(%62 : memref<!tpu.dma_semaphore, #tpu.memory_space<semaphore_mem>>) src(%59 : memref<1x128xf32, #tpu.memory_space<any>>) dst(%60 : memref<1x128xf32, #tpu.memory_space<vmem>>)
    }
    %c0_38 = arith.constant 0 : index
    %c0_39 = arith.constant 0 : index
    %31 = vector.load %arg14[%c0_38, %c0_39] : memref<16x256xf32, #tpu.memory_space<vmem>>, vector<16x256xf32>
    %cst_40 = arith.constant 1.000000e+00 : f32
    %32 = vector.broadcast %cst_40 : f32 to vector<1x256xf32>
    %cst_41 = arith.constant dense<0.000000e+00> : vector<16x128xf32>
    %33 = tpu.matmul %31, %29, %cst_41 {dimension_numbers = #tpu.dot_dimension_numbers<[1], [1], [0], [0], [0, 0, 1, 0], [], []>} : vector<16x256xf32>, vector<128x256xf32>, vector<16x128xf32> -> vector<16x128xf32>
    %34 = arith.mulf %31, %31 : vector<16x256xf32>
    %cst_42 = arith.constant 2.000000e-06 : f32
    %35 = vector.broadcast %cst_42 : f32 to vector<16x256xf32>
    %36 = arith.mulf %35, %31 : vector<16x256xf32>
    %37 = arith.addf %34, %36 : vector<16x256xf32>
    %cst_43 = arith.constant dense<0.000000e+00> : vector<16x1xf32>
    %38 = tpu.matmul %37, %32, %cst_43 {dimension_numbers = #tpu.dot_dimension_numbers<[1], [1], [0], [0], [0, 0, 1, 0], [], []>} : vector<16x256xf32>, vector<1x256xf32>, vector<16x1xf32> -> vector<16x1xf32>
    %39 = arith.mulf %29, %29 : vector<128x256xf32>
    %cst_44 = arith.constant 2.000000e-06 : f32
    %40 = vector.broadcast %cst_44 : f32 to vector<128x256xf32>
    %41 = arith.mulf %40, %29 : vector<128x256xf32>
    %42 = arith.subf %39, %41 : vector<128x256xf32>
    %cst_45 = arith.constant dense<0.000000e+00> : vector<1x128xf32>
    %43 = tpu.matmul %32, %42, %cst_45 {dimension_numbers = #tpu.dot_dimension_numbers<[1], [1], [0], [0], [0, 0, 1, 0], [], []>} : vector<1x256xf32>, vector<128x256xf32>, vector<1x128xf32> -> vector<1x128xf32>
    %44 = vector.broadcast %38 : vector<16x1xf32> to vector<16x128xf32>
    %45 = vector.broadcast %43 : vector<1x128xf32> to vector<16x128xf32>
    %46 = arith.addf %44, %45 : vector<16x128xf32>
    %cst_46 = arith.constant 2.000000e+00 : f32
    %47 = vector.broadcast %cst_46 : f32 to vector<16x128xf32>
    %48 = arith.mulf %47, %33 : vector<16x128xf32>
    %49 = arith.subf %46, %48 : vector<16x128xf32>
    %cst_47 = arith.constant 2.560000e-10 : f32
    %50 = vector.broadcast %cst_47 : f32 to vector<16x128xf32>
    %51 = arith.addf %49, %50 : vector<16x128xf32>
    %cst_48 = arith.constant 0.000000e+00 : f32
    %52 = vector.broadcast %cst_48 : f32 to vector<16x128xf32>
    %53 = arith.maximumf %51, %52 : vector<16x128xf32>
    %54 = math.sqrt %53 : vector<16x128xf32>
    %cst_49 = arith.constant 0.000000e+00 : f32
    %55 = vector.broadcast %cst_49 : f32 to vector<16x128xf32>
    %56 = arith.subf %55, %54 : vector<16x128xf32>
    %c0_50 = arith.constant 0 : index
    %c0_51 = arith.constant 0 : index
    %57 = vector.load %arg12[%c0_50, %c0_51] : memref<16x128xf32, #tpu.memory_space<vmem>>, vector<16x128xf32>
    tpu.vector_store %arg12[%c0_50, %c0_51], %56 {strides = array<i32>} : memref<16x128xf32, #tpu.memory_space<vmem>>, vector<16x128xf32>,
    return
  }
  func.func @transform_0(%arg0: i32, %arg1: memref<8xi32, #tpu.memory_space<smem>>, %arg2: memref<16xi32, #tpu.memory_space<smem>>) -> (i32, i32) {
    %c0_i32 = arith.constant 0 : i32
    %c0_i32_0 = arith.constant 0 : i32
    %c0_i32_1 = arith.constant 0 : i32
    return %c0_i32, %c0_i32_0 : i32, i32
  }
  func.func @transform_1(%arg0: i32, %arg1: memref<8xi32, #tpu.memory_space<smem>>, %arg2: memref<16xi32, #tpu.memory_space<smem>>) -> (i32, i32) {
    %c0_i32 = arith.constant 0 : i32
    %c0_i32_0 = arith.constant 0 : i32
    %c0_i32_1 = arith.constant 0 : i32
    return %c0_i32, %c0_i32_0 : i32, i32
  }
  func.func @transform_2(%arg0: i32, %arg1: memref<8xi32, #tpu.memory_space<smem>>, %arg2: memref<16xi32, #tpu.memory_space<smem>>) -> (i32, i32) {
    %c0_i32 = arith.constant 0 : i32
    %c0_i32_0 = arith.constant 0 : i32
    %c0_i32_1 = arith.constant 0 : i32
    return %c0_i32, %c0_i32_0 : i32, i32
  }
  func.func @transform_4(%arg0: i32, %arg1: memref<8xi32, #tpu.memory_space<smem>>, %arg2: memref<16xi32, #tpu.memory_space<smem>>) -> (i32, i32) {
    %c0_i32 = arith.constant 0 : i32
    %c0_i32_0 = arith.constant 0 : i32
    return %arg0, %c0_i32 : i32, i32
  }
  func.func @transform_6(%arg0: i32, %arg1: memref<8xi32, #tpu.memory_space<smem>>, %arg2: memref<16xi32, #tpu.memory_space<smem>>) -> (i32, i32) {
    %c0_i32 = arith.constant 0 : i32
    %c0_i32_0 = arith.constant 0 : i32
    %c0_i32_1 = arith.constant 0 : i32
    return %c0_i32, %c0_i32_0 : i32, i32
  }
  func.func @transform_7(%arg0: i32, %arg1: memref<8xi32, #tpu.memory_space<smem>>, %arg2: memref<16xi32, #tpu.memory_space<smem>>) -> (i32, i32) {
    %c0_i32 = arith.constant 0 : i32
    %c0_i32_0 = arith.constant 0 : i32
    %c0_i32_1 = arith.constant 0 : i32
    return %c0_i32, %c0_i32_0 : i32, i32
  }
  func.func @transform_8(%arg0: i32, %arg1: memref<8xi32, #tpu.memory_space<smem>>, %arg2: memref<16xi32, #tpu.memory_space<smem>>) -> (i32, i32) {
    %c0_i32 = arith.constant 0 : i32
    %c0_i32_0 = arith.constant 0 : i32
    %c0_i32_1 = arith.constant 0 : i32
    return %c0_i32, %c0_i32_0 : i32, i32
  }
  func.func @transform_9(%arg0: i32, %arg1: memref<8xi32, #tpu.memory_space<smem>>, %arg2: memref<16xi32, #tpu.memory_space<smem>>) -> (i32, i32) {
    %c0_i32 = arith.constant 0 : i32
    %c0_i32_0 = arith.constant 0 : i32
    return %arg0, %c0_i32 : i32, i32
  }
}

</mosaic_0001>

<llo_original>
// kernel: proto_forward.1
$region0: #{proto_forward.1}
  #allocation0 [shape = 'u32[]', space=smem, size = 0x4, offset = 0x4, fixed_abs, tag = 'smem constant byte address 0x4 - core index']
  #allocation1 [shape = 'u32[144,128]{1,0:T(1,128)}', space=vmem, size = 0x12000, scoped, tag = 'internal scratch']
  #allocation2 [shape = 'f32[8,256]{1,0:T(8,128)}', space=vmem, size = 0x2000, scoped, tag = 'scratch operand']
  #allocation3 [shape = 'f32[16,256]{1,0:T(8,128)}', space=vmem, size = 0x4000, scoped, tag = 'scratch operand']
  #allocation4 [shape = 's32[1]{0}', space=sflag, size = 0x4, scoped, tag = 'scratch operand']
  #allocation5 [shape = 's32[1]{0}', space=sflag, size = 0x4, scoped, tag = 'scratch operand']
  #allocation6 [shape = 's32[1]{0}', space=sflag, size = 0x4, scoped, tag = 'scoped memory for proto_forward.1']
  #allocation7 [shape = 'u8[512]{0}', space=smem, size = 0x200, scoped, tag = 'prefetched SMEM operand 0']
  #allocation8 [shape = 'u8[512]{0}', space=smem, size = 0x200, scoped, tag = 'prefetched SMEM operand 1']
  #allocation13 [shape = 's32[]', space=sflag, size = 0x4, offset = 0, fixed_abs, tag = 'sflag constant byte address 0x0 - dummy sync flag']
  #allocation14 [shape = 's32[]', space=sflag, size = 0x4, offset = 0, fixed_abs, tag = 'sflag constant byte address 0x0 - dummy sync flag']
  %s0 = inlined_call_operand.vmem [shape: s32[8], index: 0, kind: input, shape index: {}]
  %s1 = inlined_call_operand.vmem [shape: s32[16], index: 1, kind: input, shape index: {}]
  %s2 = inlined_call_operand.vmem [shape: f32[128,256], index: 2, kind: input, shape index: {}]
  %s3 = inlined_call_operand.vmem [shape: f32[128,8], index: 3, kind: input, shape index: {}]
  %s4 = inlined_call_operand.vmem [shape: f32[8,128], index: 4, kind: input, shape index: {}]
  %s5 = inlined_call_operand.vmem [shape: f32[8,8,128], index: 5, kind: input, shape index: {}]
  %s6 = inlined_call_operand.vmem [shape: f32[16,128], index: 6, kind: input, shape index: {}]
  %s7 = inlined_call_operand.vmem [shape: f32[16,8,128], index: 7, kind: input, shape index: {}]
  %s8 = inlined_call_operand.hbm [shape: f32[256,256], index: 8, kind: input, shape index: {}]
  %s9 = inlined_call_operand.hbm [shape: f32[256,256], index: 9, kind: input, shape index: {}]
  %s10 = inlined_call_operand.vmem [shape: f32[1,256], index: 10, kind: input, shape index: {}]
  %s11 = inlined_call_operand.vmem [shape: f32[16,128], index: 11, kind: output, shape index: {}]
  %s12 = sld [smem:[#allocation0]]
  $region134: #{proto_forward.1} parent=0
    _
  %s14 = ssub.s32 1, %s12
  %s15 = scalar_select 0, %s14, %s12
  %s16 = sshll.u32 %s0, 4
  %s17 = int_to_ptr.vmem [resolvable:$true] %s16
  %19 = dma.vmem_to_smem %s17, 16, [#allocation7], [#allocation6]
  %s20 = sshll.u32 %s1, 4
  %s21 = int_to_ptr.vmem [resolvable:$true] %s20
  %23 = dma.vmem_to_smem %s21, 16, [#allocation8], [#allocation6]
  %24 = dma.done [#allocation6], 32
  %25 = sfence
  $region1: #{proto_forward.1} parent=0
    #allocation9 [shape = 'u8[262144]{0}', space=vmem, size = 0x40000, scoped, tag = 'input window, operand 8, single buffered']
    #allocation10 [shape = 's32[1]{0}', space=sflag, size = 0x4, scoped, tag = 'scoped memory for proto_forward.1']
    #allocation11 [shape = 'u8[262144]{0}', space=vmem, size = 0x40000, scoped, tag = 'input window, operand 9, single buffered']
    #allocation12 [shape = 's32[1]{0}', space=sflag, size = 0x4, scoped, tag = 'scoped memory for proto_forward.1']
    %26 = vsyncpa [#allocation10], 0
    %27 = vsyncpa [#allocation12], 0
    // Predicated region
    $region2: #{proto_forward.1} parent=1 // pred_check
      _
    $region3: #{proto_forward.1} parent=1 // pred_check_branch
      %29 = sbr.rel (0) target = $region5
    $region4: #{proto_forward.1} parent=1 // pred_region
      _
    $region5: #{proto_forward.1} parent=1 // pred_fallthru
      _
    // Predicated region
    $region6: #{proto_forward.1} parent=1 // pred_check
      _
    $region7: #{proto_forward.1} parent=1 // pred_check_branch
      %31 = sbr.rel (0) target = $region9
    $region8: #{proto_forward.1} parent=1 // pred_region
      _
    $region9: #{proto_forward.1} parent=1 // pred_fallthru
      _
    // Predicated region
    $region10: #{proto_forward.1} parent=1 // pred_check
      _
    $region11: #{proto_forward.1} parent=1 // pred_check_branch
      %33 = sbr.rel (0) target = $region13
    $region12: #{proto_forward.1} parent=1 // pred_region
      _
    $region13: #{proto_forward.1} parent=1 // pred_fallthru
      _
    // Predicated region
    $region14: #{proto_forward.1} parent=1 // pred_check
      _
    $region15: #{proto_forward.1} parent=1 // pred_check_branch
      %35 = sbr.rel (0) target = $region17
    $region16: #{proto_forward.1} parent=1 // pred_region
      _
    $region17: #{proto_forward.1} parent=1 // pred_fallthru
      _
    // Predicated region
    $region18: #{proto_forward.1} parent=1 // pred_check
      _
    $region19: #{proto_forward.1} parent=1 // pred_check_branch
      %37 = sbr.rel (0) target = $region21
    $region20: #{proto_forward.1} parent=1 // pred_region
      %s39 = ssub.s32 8192, 8192
      %40 = vsyncadd [#allocation10], %s39
      %s41 = sshll.u32 [#allocation9], 4
      %s42 = int_to_ptr.vmem [resolvable:$true] %s41
      %47 = dma.hbm_to_vmem [thread:$0]  %s8, 8192, %s42, [#allocation10], 256, 256, 16
    $region21: #{proto_forward.1} parent=1 // pred_fallthru
      _
    // Predicated region
    $region22: #{proto_forward.1} parent=1 // pred_check
      _
    $region23: #{proto_forward.1} parent=1 // pred_check_branch
      %49 = sbr.rel (0) target = $region25
    $region24: #{proto_forward.1} parent=1 // pred_region
      %s51 = ssub.s32 8192, 8192
      %52 = vsyncadd [#allocation12], %s51
      %s53 = sshll.u32 [#allocation11], 4
      %s54 = int_to_ptr.vmem [resolvable:$true] %s53
      %59 = dma.hbm_to_vmem [thread:$0]  %s9, 8192, %s54, [#allocation12], 256, 256, 16
    $region25: #{proto_forward.1} parent=1 // pred_fallthru
      _
    // Predicated region
    $region26: #{proto_forward.1} parent=1 // pred_check
      _
    $region27: #{proto_forward.1} parent=1 // pred_check_branch
      %61 = sbr.rel (0) target = $region29
    $region28: #{proto_forward.1} parent=1 // pred_region
      _
    $region29: #{proto_forward.1} parent=1 // pred_fallthru
      _
    // Predicated region
    $region30: #{proto_forward.1} parent=1 // pred_check
      _
    $region31: #{proto_forward.1} parent=1 // pred_check_branch
      %63 = sbr.rel (0) target = $region33
    $region32: #{proto_forward.1} parent=1 // pred_region
      %64 = dma.done [#allocation10], 8192
    $region33: #{proto_forward.1} parent=1 // pred_fallthru
      _
    // Predicated region
    $region34: #{proto_forward.1} parent=1 // pred_check
      _
    $region35: #{proto_forward.1} parent=1 // pred_check_branch
      %66 = sbr.rel (0) target = $region37
    $region36: #{proto_forward.1} parent=1 // pred_region
      %67 = dma.done [#allocation12], 8192
    $region37: #{proto_forward.1} parent=1 // pred_fallthru
      _
    %s68 = smul.u32 0, 16
    loop: start=0, step=1, limit=8
    $region38: #{proto_forward.1} parent=1 // loop_pre_header
      _
    $region39: #{proto_forward.1} parent=1 // loop_header
      %s70 = sphi 0, %s74
      %p71 = scmp.ge.s32.totalorder %s70, 8
    $region40: #{proto_forward.1} parent=1 // loop_header_branch
      %73 = sbr.rel (%p71) target = $region44
    $region41: #{proto_forward.1} parent=1 // loop_body
      %s75 = sld [smem:[#allocation7 + %s70]]
      %s76 = smul.u32 %s70, 8
      %s77 = sadd.s32 %s75, %s76
      %s78 = scalar_lea.vmem %s5, %s77
      %s79 = sshrl.u32 %s70, 3
      %s80 = sand.u32 %s70, 7
      %s81 = smul.u32 %s79, 16
      %s82 = sadd.s32 %s80, %s81
      %s83 = sadd.s32 8, %s82
      %s84 = scalar_lea.vmem [#allocation2], %s83
      %p86 = scmp.lt.u32.totalorder 1, 8
      %p87 = pneg %p86
      // Predicated region
      $region45: #{proto_forward.1} parent=41 // pred_check
        _
      $region46: #{proto_forward.1} parent=41 // pred_check_branch
        %89 = sbr.rel (%p86) target = $region48
      $region47: #{proto_forward.1} parent=41 // pred_region
        %s104 = sand.u32 1, 7
        %p105 = scmp.eq.s32.totalorder %s104, 0
        %p106 = pneg %p105
        // Predicated region
        $region60: #{proto_forward.1} parent=47 // pred_check
          _
        $region61: #{proto_forward.1} parent=47 // pred_check_branch
          %108 = sbr.rel (%p105) target = $region63
        $region62: #{proto_forward.1} parent=47 // pred_region
          %s109 = sand.u32 1, 7
          %s110 = ssub.s32 1, %s109
          %s111 = scalar_lea.vmem %s78, %s110
          %s112 = ssub.s32 1, %s109
          %s113 = scalar_lea.vmem %s84, %s112 [#allocation2]
          %s114 = sshllo.u32 0, %s109
          loop: start=0, step=1, limit=1
          $region64: #{proto_forward.1} parent=62 // loop_pre_header
            _
          $region65: #{proto_forward.1} parent=62 // loop_header
            %s116 = sphi 0, %s120
            %p117 = scmp.ge.s32.totalorder %s116, 1
            %s121 = sphi %s111, %s111
            %s122 = sphi %s113, %s113
          $region66: #{proto_forward.1} parent=62 // loop_header_branch
            %119 = sbr.rel (%p117) target = $region70
          $region67: #{proto_forward.1} parent=62 // loop_body
            %v123 = vld [vmem:[%s121] sm:%s114]
            %124 = vst [vmem:[%s122] sm:%s114] %v123
          $region68: #{proto_forward.1} parent=62 // loop_footer
            %s120 = sadd.s32 1, %s116
          $region69: #{proto_forward.1} parent=62 // loop_footer_branch
            %115 = sbr.rel target = $region65
          $region70: #{proto_forward.1} parent=62 // loop_exit
            _
        $region63: #{proto_forward.1} parent=47 // pred_fallthru
          _
      $region48: #{proto_forward.1} parent=41 // pred_fallthru
        _
      // Predicated region
      $region49: #{proto_forward.1} parent=41 // pred_check
        %p90 = pneg %p86
      $region50: #{proto_forward.1} parent=41 // pred_check_branch
        %92 = sbr.rel (%p90) target = $region52
      $region51: #{proto_forward.1} parent=41 // pred_region
        %s93 = sshllo.u32 0, 1
        loop: start=0, step=1, limit=1
        $region53: #{proto_forward.1} parent=51 // loop_pre_header
          _
        $region54: #{proto_forward.1} parent=51 // loop_header
          %s95 = sphi 0, %s99
          %p96 = scmp.ge.s32.totalorder %s95, 1
          %s100 = sphi %s78, %s78
          %s101 = sphi %s84, %s84
        $region55: #{proto_forward.1} parent=51 // loop_header_branch
          %98 = sbr.rel (%p96) target = $region59
        $region56: #{proto_forward.1} parent=51 // loop_body
          %v102 = vld [vmem:[%s100] sm:%s93]
          %103 = vst [vmem:[%s101] sm:%s93] %v102
        $region57: #{proto_forward.1} parent=51 // loop_footer
          %s99 = sadd.s32 1, %s95
        $region58: #{proto_forward.1} parent=51 // loop_footer_branch
          %94 = sbr.rel target = $region54
        $region59: #{proto_forward.1} parent=51 // loop_exit
          _
      $region52: #{proto_forward.1} parent=41 // pred_fallthru
        _
      // Predicated region
      $region71: #{proto_forward.1} parent=41 // pred_check
        _
      $region72: #{proto_forward.1} parent=41 // pred_check_branch
        %127 = sbr.rel (0) target = $region74
      $region73: #{proto_forward.1} parent=41 // pred_region
        %128 = vsyncadd [#allocation4], 16
      $region74: #{proto_forward.1} parent=41 // pred_fallthru
        _
    $region42: #{proto_forward.1} parent=1 // loop_footer
      %s74 = sadd.s32 1, %s70
    $region43: #{proto_forward.1} parent=1 // loop_footer_branch
      %69 = sbr.rel target = $region39
    $region44: #{proto_forward.1} parent=1 // loop_exit
      _
    loop: start=0, step=1, limit=16
    $region75: #{proto_forward.1} parent=1 // loop_pre_header
      _
    $region76: #{proto_forward.1} parent=1 // loop_header
      %s130 = sphi 0, %s134
      %p131 = scmp.ge.s32.totalorder %s130, 16
    $region77: #{proto_forward.1} parent=1 // loop_header_branch
      %133 = sbr.rel (%p131) target = $region81
    $region78: #{proto_forward.1} parent=1 // loop_body
      %s135 = sadd.s32 %s68, %s130
      %p136 = scmp.lt.s32.totalorder %s135, 15
      %s137 = scalar_select %p136, %s135, 15
      %s138 = sld [smem:[#allocation8 + %s137]]
      %s139 = smul.u32 %s137, 8
      %s140 = sadd.s32 %s138, %s139
      %s141 = scalar_lea.vmem %s7, %s140
      %s142 = sshrl.u32 %s130, 3
      %s143 = sand.u32 %s130, 7
      %s144 = smul.u32 %s142, 16
      %s145 = sadd.s32 %s143, %s144
      %s146 = sadd.s32 8, %s145
      %s147 = scalar_lea.vmem [#allocation3], %s146
      %p149 = scmp.lt.u32.totalorder 1, 8
      %p150 = pneg %p149
      // Predicated region
      $region82: #{proto_forward.1} parent=78 // pred_check
        _
      $region83: #{proto_forward.1} parent=78 // pred_check_branch
        %152 = sbr.rel (%p149) target = $region85
      $region84: #{proto_forward.1} parent=78 // pred_region
        %s167 = sand.u32 1, 7
        %p168 = scmp.eq.s32.totalorder %s167, 0
        %p169 = pneg %p168
        // Predicated region
        $region97: #{proto_forward.1} parent=84 // pred_check
          _
        $region98: #{proto_forward.1} parent=84 // pred_check_branch
          %171 = sbr.rel (%p168) target = $region100
        $region99: #{proto_forward.1} parent=84 // pred_region
          %s172 = sand.u32 1, 7
          %s173 = ssub.s32 1, %s172
          %s174 = scalar_lea.vmem %s141, %s173
          %s175 = ssub.s32 1, %s172
          %s176 = scalar_lea.vmem %s147, %s175 [#allocation3]
          %s177 = sshllo.u32 0, %s172
          loop: start=0, step=1, limit=1
          $region101: #{proto_forward.1} parent=99 // loop_pre_header
            _
          $region102: #{proto_forward.1} parent=99 // loop_header
            %s179 = sphi 0, %s183
            %p180 = scmp.ge.s32.totalorder %s179, 1
            %s184 = sphi %s174, %s174
            %s185 = sphi %s176, %s176
          $region103: #{proto_forward.1} parent=99 // loop_header_branch
            %182 = sbr.rel (%p180) target = $region107
          $region104: #{proto_forward.1} parent=99 // loop_body
            %v186 = vld [vmem:[%s184] sm:%s177]
            %187 = vst [vmem:[%s185] sm:%s177] %v186
          $region105: #{proto_forward.1} parent=99 // loop_footer
            %s183 = sadd.s32 1, %s179
          $region106: #{proto_forward.1} parent=99 // loop_footer_branch
            %178 = sbr.rel target = $region102
          $region107: #{proto_forward.1} parent=99 // loop_exit
            _
        $region100: #{proto_forward.1} parent=84 // pred_fallthru
          _
      $region85: #{proto_forward.1} parent=78 // pred_fallthru
        _
      // Predicated region
      $region86: #{proto_forward.1} parent=78 // pred_check
        %p153 = pneg %p149
      $region87: #{proto_forward.1} parent=78 // pred_check_branch
        %155 = sbr.rel (%p153) target = $region89
      $region88: #{proto_forward.1} parent=78 // pred_region
        %s156 = sshllo.u32 0, 1
        loop: start=0, step=1, limit=1
        $region90: #{proto_forward.1} parent=88 // loop_pre_header
          _
        $region91: #{proto_forward.1} parent=88 // loop_header
          %s158 = sphi 0, %s162
          %p159 = scmp.ge.s32.totalorder %s158, 1
          %s163 = sphi %s141, %s141
          %s164 = sphi %s147, %s147
        $region92: #{proto_forward.1} parent=88 // loop_header_branch
          %161 = sbr.rel (%p159) target = $region96
        $region93: #{proto_forward.1} parent=88 // loop_body
          %v165 = vld [vmem:[%s163] sm:%s156]
          %166 = vst [vmem:[%s164] sm:%s156] %v165
        $region94: #{proto_forward.1} parent=88 // loop_footer
          %s162 = sadd.s32 1, %s158
        $region95: #{proto_forward.1} parent=88 // loop_footer_branch
          %157 = sbr.rel target = $region91
        $region96: #{proto_forward.1} parent=88 // loop_exit
          _
      $region89: #{proto_forward.1} parent=78 // pred_fallthru
        _
      // Predicated region
      $region108: #{proto_forward.1} parent=78 // pred_check
        _
      $region109: #{proto_forward.1} parent=78 // pred_check_branch
        %190 = sbr.rel (0) target = $region111
      $region110: #{proto_forward.1} parent=78 // pred_region
        %191 = vsyncadd [#allocation5], 16
      $region111: #{proto_forward.1} parent=78 // pred_fallthru
        _
    $region79: #{proto_forward.1} parent=1 // loop_footer
      %s134 = sadd.s32 1, %s130
    $region80: #{proto_forward.1} parent=1 // loop_footer_branch
      %129 = sbr.rel target = $region76
    $region81: #{proto_forward.1} parent=1 // loop_exit
      _
    %v192 = vld [vmem:[%s4] sm:$0xff]
    %193 = vst [vmem:[#allocation2] sm:$0xff] %v192
    %v194 = vld [vmem:[%s6] sm:$0xff]
    %v195 = vld [vmem:[%s6 + $0x8] sm:$0xff]
    %196 = vst [vmem:[#allocation3] sm:$0xff] %v194
    %197 = vst [vmem:[#allocation3 + $0x10] sm:$0xff] %v195
    loop: start=0, step=1, limit=8
    $region112: #{proto_forward.1} parent=1 // loop_pre_header
      _
    $region113: #{proto_forward.1} parent=1 // loop_header
      %s199 = sphi 0, %s203
      %p200 = scmp.ge.s32.totalorder %s199, 8
    $region114: #{proto_forward.1} parent=1 // loop_header_branch
      %202 = sbr.rel (%p200) target = $region118
    $region115: #{proto_forward.1} parent=1 // loop_body
      %s204 = smul.u32 1, 1
      %s205 = sshll.u32 %s204, 4
      %206 = dma.done [#allocation4], %s205
    $region116: #{proto_forward.1} parent=1 // loop_footer
      %s203 = sadd.s32 1, %s199
    $region117: #{proto_forward.1} parent=1 // loop_footer_branch
      %198 = sbr.rel target = $region113
    $region118: #{proto_forward.1} parent=1 // loop_exit
      _
    %v207 = vld [vmem:[%s3] sm:$0xff]
    %v208 = vld [vmem:[%s3 + $0x8] sm:$0xff]
    %v209 = vld [vmem:[%s3 + $0x10] sm:$0xff]
    %v210 = vld [vmem:[%s3 + $0x18] sm:$0xff]
    %v211 = vld [vmem:[%s3 + $0x20] sm:$0xff]
    %v212 = vld [vmem:[%s3 + $0x28] sm:$0xff]
    %v213 = vld [vmem:[%s3 + $0x30] sm:$0xff]
    %v214 = vld [vmem:[%s3 + $0x38] sm:$0xff]
    %v215 = vld [vmem:[%s3 + $0x40] sm:$0xff]
    %v216 = vld [vmem:[%s3 + $0x48] sm:$0xff]
    %v217 = vld [vmem:[%s3 + $0x50] sm:$0xff]
    %v218 = vld [vmem:[%s3 + $0x58] sm:$0xff]
    %v219 = vld [vmem:[%s3 + $0x60] sm:$0xff]
    %v220 = vld [vmem:[%s3 + $0x68] sm:$0xff]
    %v221 = vld [vmem:[%s3 + $0x70] sm:$0xff]
    %v222 = vld [vmem:[%s3 + $0x78] sm:$0xff]
    %v223 = vld [vmem:[#allocation2] sm:$0xff]
    %v224 = vld [vmem:[#allocation2 + $0x8] sm:$0xff]
    %vm225 = vcmask 64512
    %v227 = vsel %vm225, %v207, 0
    %v230 = vsel %vm225, %v208, 0
    %v233 = vsel %vm225, %v209, 0
    %v236 = vsel %vm225, %v210, 0
    %v239 = vsel %vm225, %v211, 0
    %v242 = vsel %vm225, %v212, 0
    %v245 = vsel %vm225, %v213, 0
    %v248 = vsel %vm225, %v214, 0
    %v251 = vsel %vm225, %v215, 0
    %v254 = vsel %vm225, %v216, 0
    %v257 = vsel %vm225, %v217, 0
    %v260 = vsel %vm225, %v218, 0
    %v263 = vsel %vm225, %v219, 0
    %v266 = vsel %vm225, %v220, 0
    %v269 = vsel %vm225, %v221, 0
    %v272 = vsel %vm225, %v222, 0
    %274 = vmatprep.subr.mxu0 %v224
    %275 = vmatpush1.msra.mxu0 %v223
    %276 = vmatprep.subr.mxu0 0.0
    %277 = vmatpush1.msra.mxu0 0.0
    %278 = vmatprep.subr.mxu0 0.0
    %279 = vmatpush1.msra.mxu0 0.0
    %280 = vmatprep.subr.mxu0 0.0
    %281 = vmatpush1.msra.mxu0 0.0
    %282 = vmatprep.subr.mxu0 0.0
    %283 = vmatpush1.msra.mxu0 0.0
    %284 = vmatprep.subr.mxu0 0.0
    %285 = vmatpush1.msra.mxu0 0.0
    %286 = vmatprep.subr.mxu0 0.0
    %287 = vmatpush1.msra.mxu0 0.0
    %288 = vmatprep.subr.mxu0 0.0
    %289 = vmatpush1.msra.mxu0 0.0
    %290 = vmatprep.subr.mxu0 0.0
    %291 = vmatpush1.msra.mxu0 0.0
    %292 = vmatprep.subr.mxu0 0.0
    %293 = vmatpush1.msra.mxu0 0.0
    %294 = vmatprep.subr.mxu0 0.0
    %295 = vmatpush1.msra.mxu0 0.0
    %296 = vmatprep.subr.mxu0 0.0
    %297 = vmatpush1.msra.mxu0 0.0
    %298 = vmatprep.subr.mxu0 0.0
    %299 = vmatpush1.msra.mxu0 0.0
    %300 = vmatprep.subr.mxu0 0.0
    %301 = vmatpush1.msra.mxu0 0.0
    %302 = vmatprep.subr.mxu0 0.0
    %303 = vmatpush1.msra.mxu0 0.0
    %304 = vmatprep.subr.mxu0 0.0
    %305 = vmatpush1.msra.mxu0 0.0
    %306 = vmatprep.subr.mxu0 0.0
    %307 = vmatpush1.msra.mxu0 0.0
    %308 = vmatprep.subr.mxu0 0.0
    %309 = vmatpush1.msra.mxu0 0.0
    %310 = vmatprep.subr.mxu0 0.0
    %311 = vmatpush1.msra.mxu0 0.0
    %312 = vmatprep.subr.mxu0 0.0
    %313 = vmatpush1.msra.mxu0 0.0
    %314 = vmatprep.subr.mxu0 0.0
    %315 = vmatpush1.msra.mxu0 0.0
    %316 = vmatprep.subr.mxu0 0.0
    %317 = vmatpush1.msra.mxu0 0.0
    %318 = vmatprep.subr.mxu0 0.0
    %319 = vmatpush1.msra.mxu0 0.0
    %320 = vmatprep.subr.mxu0 0.0
    %321 = vmatpush1.msra.mxu0 0.0
    %322 = vmatprep.subr.mxu0 0.0
    %323 = vmatpush1.msra.mxu0 0.0
    %324 = vmatprep.subr.mxu0 0.0
    %325 = vmatpush1.msra.mxu0 0.0
    %326 = vmatprep.subr.mxu0 0.0
    %327 = vmatpush1.msra.mxu0 0.0
    %328 = vmatprep.subr.mxu0 0.0
    %329 = vmatpush1.msra.mxu0 0.0
    %330 = vmatprep.subr.mxu0 0.0
    %331 = vmatpush1.msra.mxu0 0.0
    %332 = vmatprep.subr.mxu0 0.0
    %333 = vmatpush1.msra.mxu0 0.0
    %334 = vmatprep.subr.mxu0 0.0
    %335 = vmatpush1.msra.mxu0 0.0
    %336 = vmatprep.subr.mxu0 0.0
    %337 = vmatpush1.msra.mxu0 0.0
    %338 = vmatprep.mubr.f32.mxu0 0.0
    %339 = vmatmul.mubr.f32.gmra.mrb[0].mxu0 %v227
    %v340 = vpop.f32.mrb[0].mxu0
    %v341 = vadd.f32 0.0, %v340
    %v342 = vpop.f32.mrb[0].mxu0
    %v343 = vadd.f32 0.0, %v342
    %344 = vmatprep.mubr.f32.mxu0 0.0
    %345 = vmatmul.mubr.f32.gmra.mrb[0].mxu0 %v230
    %v346 = vpop.f32.mrb[0].mxu0
    %v347 = vadd.f32 0.0, %v346
    %v348 = vpop.f32.mrb[0].mxu0
    %v349 = vadd.f32 0.0, %v348
    %350 = vmatprep.mubr.f32.mxu0 0.0
    %351 = vmatmul.mubr.f32.gmra.mrb[0].mxu0 %v233
    %v352 = vpop.f32.mrb[0].mxu0
    %v353 = vadd.f32 0.0, %v352
    %v354 = vpop.f32.mrb[0].mxu0
    %v355 = vadd.f32 0.0, %v354
    %356 = vmatprep.mubr.f32.mxu0 0.0
    %357 = vmatmul.mubr.f32.gmra.mrb[0].mxu0 %v236
    %v358 = vpop.f32.mrb[0].mxu0
    %v359 = vadd.f32 0.0, %v358
    %v360 = vpop.f32.mrb[0].mxu0
    %v361 = vadd.f32 0.0, %v360
    %362 = vmatprep.mubr.f32.mxu0 0.0
    %363 = vmatmul.mubr.f32.gmra.mrb[0].mxu0 %v239
    %v364 = vpop.f32.mrb[0].mxu0
    %v365 = vadd.f32 0.0, %v364
    %v366 = vpop.f32.mrb[0].mxu0
    %v367 = vadd.f32 0.0, %v366
    %368 = vmatprep.mubr.f32.mxu0 0.0
    %369 = vmatmul.mubr.f32.gmra.mrb[0].mxu0 %v242
    %v370 = vpop.f32.mrb[0].mxu0
    %v371 = vadd.f32 0.0, %v370
    %v372 = vpop.f32.mrb[0].mxu0
    %v373 = vadd.f32 0.0, %v372
    %374 = vmatprep.mubr.f32.mxu0 0.0
    %375 = vmatmul.mubr.f32.gmra.mrb[0].mxu0 %v245
    %v376 = vpop.f32.mrb[0].mxu0
    %v377 = vadd.f32 0.0, %v376
    %v378 = vpop.f32.mrb[0].mxu0
    %v379 = vadd.f32 0.0, %v378
    %380 = vmatprep.mubr.f32.mxu0 0.0
    %381 = vmatmul.mubr.f32.gmra.mrb[0].mxu0 %v248
    %v382 = vpop.f32.mrb[0].mxu0
    %v383 = vadd.f32 0.0, %v382
    %v384 = vpop.f32.mrb[0].mxu0
    %v385 = vadd.f32 0.0, %v384
    %386 = vmatprep.mubr.f32.mxu0 0.0
    %387 = vmatmul.mubr.f32.gmra.mrb[0].mxu0 %v251
    %v388 = vpop.f32.mrb[0].mxu0
    %v389 = vadd.f32 0.0, %v388
    %v390 = vpop.f32.mrb[0].mxu0
    %v391 = vadd.f32 0.0, %v390
    %392 = vmatprep.mubr.f32.mxu0 0.0
    %393 = vmatmul.mubr.f32.gmra.mrb[0].mxu0 %v254
    %v394 = vpop.f32.mrb[0].mxu0
    %v395 = vadd.f32 0.0, %v394
    %v396 = vpop.f32.mrb[0].mxu0
    %v397 = vadd.f32 0.0, %v396
    %398 = vmatprep.mubr.f32.mxu0 0.0
    %399 = vmatmul.mubr.f32.gmra.mrb[0].mxu0 %v257
    %v400 = vpop.f32.mrb[0].mxu0
    %v401 = vadd.f32 0.0, %v400
    %v402 = vpop.f32.mrb[0].mxu0
    %v403 = vadd.f32 0.0, %v402
    %404 = vmatprep.mubr.f32.mxu0 0.0
    %405 = vmatmul.mubr.f32.gmra.mrb[0].mxu0 %v260
    %v406 = vpop.f32.mrb[0].mxu0
    %v407 = vadd.f32 0.0, %v406
    %v408 = vpop.f32.mrb[0].mxu0
    %v409 = vadd.f32 0.0, %v408
    %410 = vmatprep.mubr.f32.mxu0 0.0
    %411 = vmatmul.mubr.f32.gmra.mrb[0].mxu0 %v263
    %v412 = vpop.f32.mrb[0].mxu0
    %v413 = vadd.f32 0.0, %v412
    %v414 = vpop.f32.mrb[0].mxu0
    %v415 = vadd.f32 0.0, %v414
    %416 = vmatprep.mubr.f32.mxu0 0.0
    %417 = vmatmul.mubr.f32.gmra.mrb[0].mxu0 %v266
    %v418 = vpop.f32.mrb[0].mxu0
    %v419 = vadd.f32 0.0, %v418
    %v420 = vpop.f32.mrb[0].mxu0
    %v421 = vadd.f32 0.0, %v420
    %422 = vmatprep.mubr.f32.mxu0 0.0
    %423 = vmatmul.mubr.f32.gmra.mrb[0].mxu0 %v269
    %v424 = vpop.f32.mrb[0].mxu0
    %v425 = vadd.f32 0.0, %v424
    %v426 = vpop.f32.mrb[0].mxu0
    %v427 = vadd.f32 0.0, %v426
    %428 = vmatprep.mubr.f32.mxu0 0.0
    %429 = vmatmul.mubr.f32.gmra.mrb[0].mxu0 %v272
    %v430 = vpop.f32.mrb[0].mxu0
    %v431 = vadd.f32 0.0, %v430
    %v432 = vpop.f32.mrb[0].mxu0
    %v433 = vadd.f32 0.0, %v432
    %434 = vdwg.mxu0
    %v435 = vld [vmem:[%s2] sm:$0xff]
    %v436 = vld [vmem:[%s2 + $0x8] sm:$0xff]
    %v437 = vld [vmem:[%s2 + $0x10] sm:$0xff]
    %v438 = vld [vmem:[%s2 + $0x18] sm:$0xff]
    %v439 = vld [vmem:[%s2 + $0x20] sm:$0xff]
    %v440 = vld [vmem:[%s2 + $0x28] sm:$0xff]
    %v441 = vld [vmem:[%s2 + $0x30] sm:$0xff]
    %v442 = vld [vmem:[%s2 + $0x38] sm:$0xff]
    %v443 = vld [vmem:[%s2 + $0x40] sm:$0xff]
    %v444 = vld [vmem:[%s2 + $0x48] sm:$0xff]
    %v445 = vld [vmem:[%s2 + $0x50] sm:$0xff]
    %v446 = vld [vmem:[%s2 + $0x58] sm:$0xff]
    %v447 = vld [vmem:[%s2 + $0x60] sm:$0xff]
    %v448 = vld [vmem:[%s2 + $0x68] sm:$0xff]
    %v449 = vld [vmem:[%s2 + $0x70] sm:$0xff]
    %v450 = vld [vmem:[%s2 + $0x78] sm:$0xff]
    %v451 = vld [vmem:[%s2 + $0x80] sm:$0xff]
    %v452 = vld [vmem:[%s2 + $0x88] sm:$0xff]
    %v453 = vld [vmem:[%s2 + $0x90] sm:$0xff]
    %v454 = vld [vmem:[%s2 + $0x98] sm:$0xff]
    %v455 = vld [vmem:[%s2 + $0xa0] sm:$0xff]
    %v456 = vld [vmem:[%s2 + $0xa8] sm:$0xff]
    %v457 = vld [vmem:[%s2 + $0xb0] sm:$0xff]
    %v458 = vld [vmem:[%s2 + $0xb8] sm:$0xff]
    %v459 = vld [vmem:[%s2 + $0xc0] sm:$0xff]
    %v460 = vld [vmem:[%s2 + $0xc8] sm:$0xff]
    %v461 = vld [vmem:[%s2 + $0xd0] sm:$0xff]
    %v462 = vld [vmem:[%s2 + $0xd8] sm:$0xff]
    %v463 = vld [vmem:[%s2 + $0xe0] sm:$0xff]
    %v464 = vld [vmem:[%s2 + $0xe8] sm:$0xff]
    %v465 = vld [vmem:[%s2 + $0xf0] sm:$0xff]
    %v466 = vld [vmem:[%s2 + $0xf8] sm:$0xff]
    %v467 = vld [vmem:[#allocation9] sm:$0xff]
    %v468 = vld [vmem:[#allocation9 + $0x8] sm:$0xff]
    %v469 = vld [vmem:[#allocation9 + $0x10] sm:$0xff]
    %v470 = vld [vmem:[#allocation9 + $0x18] sm:$0xff]
    %v471 = vld [vmem:[#allocation9 + $0x20] sm:$0xff]
    %v472 = vld [vmem:[#allocation9 + $0x28] sm:$0xff]
    %v473 = vld [vmem:[#allocation9 + $0x30] sm:$0xff]
    %v474 = vld [vmem:[#allocation9 + $0x38] sm:$0xff]
    %v475 = vld [vmem:[#allocation9 + $0x40] sm:$0xff]
    %v476 = vld [vmem:[#allocation9 + $0x48] sm:$0xff]
    %v477 = vld [vmem:[#allocation9 + $0x50] sm:$0xff]
    %v478 = vld [vmem:[#allocation9 + $0x58] sm:$0xff]
    %v479 = vld [vmem:[#allocation9 + $0x60] sm:$0xff]
    %v480 = vld [vmem:[#allocation9 + $0x68] sm:$0xff]
    %v481 = vld [vmem:[#allocation9 + $0x70] sm:$0xff]
    %v482 = vld [vmem:[#allocation9 + $0x78] sm:$0xff]
    %v483 = vld [vmem:[#allocation9 + $0x80] sm:$0xff]
    %v484 = vld [vmem:[#allocation9 + $0x88] sm:$0xff]
    %v485 = vld [vmem:[#allocation9 + $0x90] sm:$0xff]
    %v486 = vld [vmem:[#allocation9 + $0x98] sm:$0xff]
    %v487 = vld [vmem:[#allocation9 + $0xa0] sm:$0xff]
    %v488 = vld [vmem:[#allocation9 + $0xa8] sm:$0xff]
    %v489 = vld [vmem:[#allocation9 + $0xb0] sm:$0xff]
    %v490 = vld [vmem:[#allocation9 + $0xb8] sm:$0xff]
    %v491 = vld [vmem:[#allocation9 + $0xc0] sm:$0xff]
    %v492 = vld [vmem:[#allocation9 + $0xc8] sm:$0xff]
    %v493 = vld [vmem:[#allocation9 + $0xd0] sm:$0xff]
    %v494 = vld [vmem:[#allocation9 + $0xd8] sm:$0xff]
    %v495 = vld [vmem:[#allocation9 + $0xe0] sm:$0xff]
    %v496 = vld [vmem:[#allocation9 + $0xe8] sm:$0xff]
    %v497 = vld [vmem:[#allocation9 + $0xf0] sm:$0xff]
    %v498 = vld [vmem:[#allocation9 + $0xf8] sm:$0xff]
    %v499 = vld [vmem:[#allocation9 + $0x100] sm:$0xff]
    %v500 = vld [vmem:[#allocation9 + $0x108] sm:$0xff]
    %v501 = vld [vmem:[#allocation9 + $0x110] sm:$0xff]
    %v502 = vld [vmem:[#allocation9 + $0x118] sm:$0xff]
    %v503 = vld [vmem:[#allocation9 + $0x120] sm:$0xff]
    %v504 = vld [vmem:[#allocation9 + $0x128] sm:$0xff]
    %v505 = vld [vmem:[#allocation9 + $0x130] sm:$0xff]
    %v506 = vld [vmem:[#allocation9 + $0x138] sm:$0xff]
    %v507 = vld [vmem:[#allocation9 + $0x140] sm:$0xff]
    %v508 = vld [vmem:[#allocation9 + $0x148] sm:$0xff]
    %v509 = vld [vmem:[#allocation9 + $0x150] sm:$0xff]
    %v510 = vld [vmem:[#allocation9 + $0x158] sm:$0xff]
    %v511 = vld [vmem:[#allocation9 + $0x160] sm:$0xff]
    %v512 = vld [vmem:[#allocation9 + $0x168] sm:$0xff]
    %v513 = vld [vmem:[#allocation9 + $0x170] sm:$0xff]
    %v514 = vld [vmem:[#allocation9 + $0x178] sm:$0xff]
    %v515 = vld [vmem:[#allocation9 + $0x180] sm:$0xff]
    %v516 = vld [vmem:[#allocation9 + $0x188] sm:$0xff]
    %v517 = vld [vmem:[#allocation9 + $0x190] sm:$0xff]
    %v518 = vld [vmem:[#allocation9 + $0x198] sm:$0xff]
    %v519 = vld [vmem:[#allocation9 + $0x1a0] sm:$0xff]
    %v520 = vld [vmem:[#allocation9 + $0x1a8] sm:$0xff]
    %v521 = vld [vmem:[#allocation9 + $0x1b0] sm:$0xff]
    %v522 = vld [vmem:[#allocation9 + $0x1b8] sm:$0xff]
    %v523 = vld [vmem:[#allocation9 + $0x1c0] sm:$0xff]
    %v524 = vld [vmem:[#allocation9 + $0x1c8] sm:$0xff]
    %v525 = vld [vmem:[#allocation9 + $0x1d0] sm:$0xff]
    %v526 = vld [vmem:[#allocation9 + $0x1d8] sm:$0xff]
    %v527 = vld [vmem:[#allocation9 + $0x1e0] sm:$0xff]
    %v528 = vld [vmem:[#allocation9 + $0x1e8] sm:$0xff]
    %v529 = vld [vmem:[#allocation9 + $0x1f0] sm:$0xff]
    %v530 = vld [vmem:[#allocation9 + $0x1f8] sm:$0xff]
    %v531 = vld [vmem:[#allocation11] sm:$0xff]
    %v532 = vld [vmem:[#allocation11 + $0x8] sm:$0xff]
    %v533 = vld [vmem:[#allocation11 + $0x10] sm:$0xff]
    %v534 = vld [vmem:[#allocation11 + $0x18] sm:$0xff]
    %v535 = vld [vmem:[#allocation11 + $0x20] sm:$0xff]
    %v536 = vld [vmem:[#allocation11 + $0x28] sm:$0xff]
    %v537 = vld [vmem:[#allocation11 + $0x30] sm:$0xff]
    %v538 = vld [vmem:[#allocation11 + $0x38] sm:$0xff]
    %v539 = vld [vmem:[#allocation11 + $0x40] sm:$0xff]
    %v540 = vld [vmem:[#allocation11 + $0x48] sm:$0xff]
    %v541 = vld [vmem:[#allocation11 + $0x50] sm:$0xff]
    %v542 = vld [vmem:[#allocation11 + $0x58] sm:$0xff]
    %v543 = vld [vmem:[#allocation11 + $0x60] sm:$0xff]
    %v544 = vld [vmem:[#allocation11 + $0x68] sm:$0xff]
    %v545 = vld [vmem:[#allocation11 + $0x70] sm:$0xff]
    %v546 = vld [vmem:[#allocation11 + $0x78] sm:$0xff]
    %v547 = vld [vmem:[#allocation11 + $0x80] sm:$0xff]
    %v548 = vld [vmem:[#allocation11 + $0x88] sm:$0xff]
    %v549 = vld [vmem:[#allocation11 + $0x90] sm:$0xff]
    %v550 = vld [vmem:[#allocation11 + $0x98] sm:$0xff]
    %v551 = vld [vmem:[#allocation11 + $0xa0] sm:$0xff]
    %v552 = vld [vmem:[#allocation11 + $0xa8] sm:$0xff]
    %v553 = vld [vmem:[#allocation11 + $0xb0] sm:$0xff]
    %v554 = vld [vmem:[#allocation11 + $0xb8] sm:$0xff]
    %v555 = vld [vmem:[#allocation11 + $0xc0] sm:$0xff]
    %v556 = vld [vmem:[#allocation11 + $0xc8] sm:$0xff]
    %v557 = vld [vmem:[#allocation11 + $0xd0] sm:$0xff]
    %v558 = vld [vmem:[#allocation11 + $0xd8] sm:$0xff]
    %v559 = vld [vmem:[#allocation11 + $0xe0] sm:$0xff]
    %v560 = vld [vmem:[#allocation11 + $0xe8] sm:$0xff]
    %v561 = vld [vmem:[#allocation11 + $0xf0] sm:$0xff]
    %v562 = vld [vmem:[#allocation11 + $0xf8] sm:$0xff]
    %v563 = vld [vmem:[#allocation11 + $0x100] sm:$0xff]
    %v564 = vld [vmem:[#allocation11 + $0x108] sm:$0xff]
    %v565 = vld [vmem:[#allocation11 + $0x110] sm:$0xff]
    %v566 = vld [vmem:[#allocation11 + $0x118] sm:$0xff]
    %v567 = vld [vmem:[#allocation11 + $0x120] sm:$0xff]
    %v568 = vld [vmem:[#allocation11 + $0x128] sm:$0xff]
    %v569 = vld [vmem:[#allocation11 + $0x130] sm:$0xff]
    %v570 = vld [vmem:[#allocation11 + $0x138] sm:$0xff]
    %v571 = vld [vmem:[#allocation11 + $0x140] sm:$0xff]
    %v572 = vld [vmem:[#allocation11 + $0x148] sm:$0xff]
    %v573 = vld [vmem:[#allocation11 + $0x150] sm:$0xff]
    %v574 = vld [vmem:[#allocation11 + $0x158] sm:$0xff]
    %v575 = vld [vmem:[#allocation11 + $0x160] sm:$0xff]
    %v576 = vld [vmem:[#allocation11 + $0x168] sm:$0xff]
    %v577 = vld [vmem:[#allocation11 + $0x170] sm:$0xff]
    %v578 = vld [vmem:[#allocation11 + $0x178] sm:$0xff]
    %v579 = vld [vmem:[#allocation11 + $0x180] sm:$0xff]
    %v580 = vld [vmem:[#allocation11 + $0x188] sm:$0xff]
    %v581 = vld [vmem:[#allocation11 + $0x190] sm:$0xff]
    %v582 = vld [vmem:[#allocation11 + $0x198] sm:$0xff]
    %v583 = vld [vmem:[#allocation11 + $0x1a0] sm:$0xff]
    %v584 = vld [vmem:[#allocation11 + $0x1a8] sm:$0xff]
    %v585 = vld [vmem:[#allocation11 + $0x1b0] sm:$0xff]
    %v586 = vld [vmem:[#allocation11 + $0x1b8] sm:$0xff]
    %v587 = vld [vmem:[#allocation11 + $0x1c0] sm:$0xff]
    %v588 = vld [vmem:[#allocation11 + $0x1c8] sm:$0xff]
    %v589 = vld [vmem:[#allocation11 + $0x1d0] sm:$0xff]
    %v590 = vld [vmem:[#allocation11 + $0x1d8] sm:$0xff]
    %v591 = vld [vmem:[#allocation11 + $0x1e0] sm:$0xff]
    %v592 = vld [vmem:[#allocation11 + $0x1e8] sm:$0xff]
    %v593 = vld [vmem:[#allocation11 + $0x1f0] sm:$0xff]
    %v594 = vld [vmem:[#allocation11 + $0x1f8] sm:$0xff]
    %595 = vmatprep.subr.mxu0 %v532
    %596 = vmatpush1.msra.mxu0 %v531
    %597 = vmatprep.subr.mxu0 %v534
    %598 = vmatpush1.msra.mxu0 %v533
    %599 = vmatprep.subr.mxu0 %v536
    %600 = vmatpush1.msra.mxu0 %v535
    %601 = vmatprep.subr.mxu0 %v538
    %602 = vmatpush1.msra.mxu0 %v537
    %603 = vmatprep.subr.mxu0 %v540
    %604 = vmatpush1.msra.mxu0 %v539
    %605 = vmatprep.subr.mxu0 %v542
    %606 = vmatpush1.msra.mxu0 %v541
    %607 = vmatprep.subr.mxu0 %v544
    %608 = vmatpush1.msra.mxu0 %v543
    %609 = vmatprep.subr.mxu0 %v546
    %610 = vmatpush1.msra.mxu0 %v545
    %611 = vmatprep.subr.mxu0 %v548
    %612 = vmatpush1.msra.mxu0 %v547
    %613 = vmatprep.subr.mxu0 %v550
    %614 = vmatpush1.msra.mxu0 %v549
    %615 = vmatprep.subr.mxu0 %v552
    %616 = vmatpush1.msra.mxu0 %v551
    %617 = vmatprep.subr.mxu0 %v554
    %618 = vmatpush1.msra.mxu0 %v553
    %619 = vmatprep.subr.mxu0 %v556
    %620 = vmatpush1.msra.mxu0 %v555
    %621 = vmatprep.subr.mxu0 %v558
    %622 = vmatpush1.msra.mxu0 %v557
    %623 = vmatprep.subr.mxu0 %v560
    %624 = vmatpush1.msra.mxu0 %v559
    %625 = vmatprep.subr.mxu0 %v562
    %626 = vmatpush1.msra.mxu0 %v561
    %627 = vmatprep.subr.mxu0 %v564
    %628 = vmatpush1.msra.mxu0 %v563
    %629 = vmatprep.subr.mxu0 %v566
    %630 = vmatpush1.msra.mxu0 %v565
    %631 = vmatprep.subr.mxu0 %v568
    %632 = vmatpush1.msra.mxu0 %v567
    %633 = vmatprep.subr.mxu0 %v570
    %634 = vmatpush1.msra.mxu0 %v569
    %635 = vmatprep.subr.mxu0 %v572
    %636 = vmatpush1.msra.mxu0 %v571
    %637 = vmatprep.subr.mxu0 %v574
    %638 = vmatpush1.msra.mxu0 %v573
    %639 = vmatprep.subr.mxu0 %v576
    %640 = vmatpush1.msra.mxu0 %v575
    %641 = vmatprep.subr.mxu0 %v578
    %642 = vmatpush1.msra.mxu0 %v577
    %643 = vmatprep.subr.mxu0 %v580
    %644 = vmatpush1.msra.mxu0 %v579
    %645 = vmatprep.subr.mxu0 %v582
    %646 = vmatpush1.msra.mxu0 %v581
    %647 = vmatprep.subr.mxu0 %v584
    %648 = vmatpush1.msra.mxu0 %v583
    %649 = vmatprep.subr.mxu0 %v586
    %650 = vmatpush1.msra.mxu0 %v585
    %651 = vmatprep.subr.mxu0 %v588
    %652 = vmatpush1.msra.mxu0 %v587
    %653 = vmatprep.subr.mxu0 %v590
    %654 = vmatpush1.msra.mxu0 %v589
    %655 = vmatprep.subr.mxu0 %v592
    %656 = vmatpush1.msra.mxu0 %v591
    %657 = vmatprep.subr.mxu0 %v594
    %658 = vmatpush1.msra.mxu0 %v593
    %659 = vmatprep.mubr.f32.mxu0 %v436
    %660 = vmatmul.mubr.f32.gmra.mrb[0].mxu0 %v435
    %v661 = vpop.f32.mrb[0].mxu0
    %v662 = vadd.f32 0.0, %v661
    %v663 = vpop.f32.mrb[0].mxu0
    %v664 = vadd.f32 0.0, %v663
    %665 = vmatprep.mubr.f32.mxu0 %v438
    %666 = vmatmul.mubr.f32.gmra.mrb[0].mxu0 %v437
    %v667 = vpop.f32.mrb[0].mxu0
    %v668 = vadd.f32 0.0, %v667
    %v669 = vpop.f32.mrb[0].mxu0
    %v670 = vadd.f32 0.0, %v669
    %671 = vmatprep.mubr.f32.mxu0 %v440
    %672 = vmatmul.mubr.f32.gmra.mrb[0].mxu0 %v439
    %v673 = vpop.f32.mrb[0].mxu0
    %v674 = vadd.f32 0.0, %v673
    %v675 = vpop.f32.mrb[0].mxu0
    %v676 = vadd.f32 0.0, %v675
    %677 = vmatprep.mubr.f32.mxu0 %v442
    %678 = vmatmul.mubr.f32.gmra.mrb[0].mxu0 %v441
    %v679 = vpop.f32.mrb[0].mxu0
    %v680 = vadd.f32 0.0, %v679
    %v681 = vpop.f32.mrb[0].mxu0
    %v682 = vadd.f32 0.0, %v681
    %683 = vmatprep.mubr.f32.mxu0 %v444
    %684 = vmatmul.mubr.f32.gmra.mrb[0].mxu0 %v443
    %v685 = vpop.f32.mrb[0].mxu0
    %v686 = vadd.f32 0.0, %v685
    %v687 = vpop.f32.mrb[0].mxu0
    %v688 = vadd.f32 0.0, %v687
    %689 = vmatprep.mubr.f32.mxu0 %v446
    %690 = vmatmul.mubr.f32.gmra.mrb[0].mxu0 %v445
    %v691 = vpop.f32.mrb[0].mxu0
    %v692 = vadd.f32 0.0, %v691
    %v693 = vpop.f32.mrb[0].mxu0
    %v694 = vadd.f32 0.0, %v693
    %695 = vmatprep.mubr.f32.mxu0 %v448
    %696 = vmatmul.mubr.f32.gmra.mrb[0].mxu0 %v447
    %v697 = vpop.f32.mrb[0].mxu0
    %v698 = vadd.f32 0.0, %v697
    %v699 = vpop.f32.mrb[0].mxu0
    %v700 = vadd.f32 0.0, %v699
    %701 = vmatprep.mubr.f32.mxu0 %v450
    %702 = vmatmul.mubr.f32.gmra.mrb[0].mxu0 %v449
    %v703 = vpop.f32.mrb[0].mxu0
    %v704 = vadd.f32 0.0, %v703
    %v705 = vpop.f32.mrb[0].mxu0
    %v706 = vadd.f32 0.0, %v705
    %707 = vmatprep.mubr.f32.mxu0 %v452
    %708 = vmatmul.mubr.f32.gmra.mrb[0].mxu0 %v451
    %v709 = vpop.f32.mrb[0].mxu0
    %v710 = vadd.f32 0.0, %v709
    %v711 = vpop.f32.mrb[0].mxu0
    %v712 = vadd.f32 0.0, %v711
    %713 = vmatprep.mubr.f32.mxu0 %v454
    %714 = vmatmul.mubr.f32.gmra.mrb[0].mxu0 %v453
    %v715 = vpop.f32.mrb[0].mxu0
    %v716 = vadd.f32 0.0, %v715
    %v717 = vpop.f32.mrb[0].mxu0
    %v718 = vadd.f32 0.0, %v717
    %719 = vmatprep.mubr.f32.mxu0 %v456
    %720 = vmatmul.mubr.f32.gmra.mrb[0].mxu0 %v455
    %v721 = vpop.f32.mrb[0].mxu0
    %v722 = vadd.f32 0.0, %v721
    %v723 = vpop.f32.mrb[0].mxu0
    %v724 = vadd.f32 0.0, %v723
    %725 = vmatprep.mubr.f32.mxu0 %v458
    %726 = vmatmul.mubr.f32.gmra.mrb[0].mxu0 %v457
    %v727 = vpop.f32.mrb[0].mxu0
    %v728 = vadd.f32 0.0, %v727
    %v729 = vpop.f32.mrb[0].mxu0
    %v730 = vadd.f32 0.0, %v729
    %731 = vmatprep.mubr.f32.mxu0 %v460
    %732 = vmatmul.mubr.f32.gmra.mrb[0].mxu0 %v459
    %v733 = vpop.f32.mrb[0].mxu0
    %v734 = vadd.f32 0.0, %v733
    %v735 = vpop.f32.mrb[0].mxu0
    %v736 = vadd.f32 0.0, %v735
    %737 = vmatprep.mubr.f32.mxu0 %v462
    %738 = vmatmul.mubr.f32.gmra.mrb[0].mxu0 %v461
    %v739 = vpop.f32.mrb[0].mxu0
    %v740 = vadd.f32 0.0, %v739
    %v741 = vpop.f32.mrb[0].mxu0
    %v742 = vadd.f32 0.0, %v741
    %743 = vmatprep.mubr.f32.mxu0 %v464
    %744 = vmatmul.mubr.f32.gmra.mrb[0].mxu0 %v463
    %v745 = vpop.f32.mrb[0].mxu0
    %v746 = vadd.f32 0.0, %v745
    %v747 = vpop.f32.mrb[0].mxu0
    %v748 = vadd.f32 0.0, %v747
    %749 = vmatprep.mubr.f32.mxu0 %v466
    %750 = vmatmul.mubr.f32.gmra.mrb[0].mxu0 %v465
    %v751 = vpop.f32.mrb[0].mxu0
    %v752 = vadd.f32 0.0, %v751
    %v753 = vpop.f32.mrb[0].mxu0
    %v754 = vadd.f32 0.0, %v753
    %755 = vdwg.mxu0
    %756 = vmatprep.subr.mxu0 %v468
    %757 = vmatpush1.msra.mxu0 %v467
    %758 = vmatprep.subr.mxu0 %v470
    %759 = vmatpush1.msra.mxu0 %v469
    %760 = vmatprep.subr.mxu0 %v472
    %761 = vmatpush1.msra.mxu0 %v471
    %762 = vmatprep.subr.mxu0 %v474
    %763 = vmatpush1.msra.mxu0 %v473
    %764 = vmatprep.subr.mxu0 %v476
    %765 = vmatpush1.msra.mxu0 %v475
    %766 = vmatprep.subr.mxu0 %v478
    %767 = vmatpush1.msra.mxu0 %v477
    %768 = vmatprep.subr.mxu0 %v480
    %769 = vmatpush1.msra.mxu0 %v479
    %770 = vmatprep.subr.mxu0 %v482
    %771 = vmatpush1.msra.mxu0 %v481
    %772 = vmatprep.subr.mxu0 %v484
    %773 = vmatpush1.msra.mxu0 %v483
    %774 = vmatprep.subr.mxu0 %v486
    %775 = vmatpush1.msra.mxu0 %v485
    %776 = vmatprep.subr.mxu0 %v488
    %777 = vmatpush1.msra.mxu0 %v487
    %778 = vmatprep.subr.mxu0 %v490
    %779 = vmatpush1.msra.mxu0 %v489
    %780 = vmatprep.subr.mxu0 %v492
    %781 = vmatpush1.msra.mxu0 %v491
    %782 = vmatprep.subr.mxu0 %v494
    %783 = vmatpush1.msra.mxu0 %v493
    %784 = vmatprep.subr.mxu0 %v496
    %785 = vmatpush1.msra.mxu0 %v495
    %786 = vmatprep.subr.mxu0 %v498
    %787 = vmatpush1.msra.mxu0 %v497
    %788 = vmatprep.subr.mxu0 %v500
    %789 = vmatpush1.msra.mxu0 %v499
    %790 = vmatprep.subr.mxu0 %v502
    %791 = vmatpush1.msra.mxu0 %v501
    %792 = vmatprep.subr.mxu0 %v504
    %793 = vmatpush1.msra.mxu0 %v503
    %794 = vmatprep.subr.mxu0 %v506
    %795 = vmatpush1.msra.mxu0 %v505
    %796 = vmatprep.subr.mxu0 %v508
    %797 = vmatpush1.msra.mxu0 %v507
    %798 = vmatprep.subr.mxu0 %v510
    %799 = vmatpush1.msra.mxu0 %v509
    %800 = vmatprep.subr.mxu0 %v512
    %801 = vmatpush1.msra.mxu0 %v511
    %802 = vmatprep.subr.mxu0 %v514
    %803 = vmatpush1.msra.mxu0 %v513
    %804 = vmatprep.subr.mxu0 %v516
    %805 = vmatpush1.msra.mxu0 %v515
    %806 = vmatprep.subr.mxu0 %v518
    %807 = vmatpush1.msra.mxu0 %v517
    %808 = vmatprep.subr.mxu0 %v520
    %809 = vmatpush1.msra.mxu0 %v519
    %810 = vmatprep.subr.mxu0 %v522
    %811 = vmatpush1.msra.mxu0 %v521
    %812 = vmatprep.subr.mxu0 %v524
    %813 = vmatpush1.msra.mxu0 %v523
    %814 = vmatprep.subr.mxu0 %v526
    %815 = vmatpush1.msra.mxu0 %v525
    %816 = vmatprep.subr.mxu0 %v528
    %817 = vmatpush1.msra.mxu0 %v527
    %818 = vmatprep.subr.mxu0 %v530
    %819 = vmatpush1.msra.mxu0 %v529
    %820 = vmatprep.mubr.f32.mxu0 %v343
    %821 = vmatmul.mubr.f32.gmra.mrb[0].mxu0 %v341
    %v822 = vpop.f32.mrb[0].mxu0
    %v823 = vadd.f32 %v662, %v822
    %v824 = vpop.f32.mrb[0].mxu0
    %v825 = vadd.f32 %v664, %v824
    %826 = vmatprep.mubr.f32.mxu0 %v349
    %827 = vmatmul.mubr.f32.gmra.mrb[0].mxu0 %v347
    %v828 = vpop.f32.mrb[0].mxu0
    %v829 = vadd.f32 %v668, %v828
    %v830 = vpop.f32.mrb[0].mxu0
    %v831 = vadd.f32 %v670, %v830
    %832 = vmatprep.mubr.f32.mxu0 %v355
    %833 = vmatmul.mubr.f32.gmra.mrb[0].mxu0 %v353
    %v834 = vpop.f32.mrb[0].mxu0
    %v835 = vadd.f32 %v674, %v834
    %v836 = vpop.f32.mrb[0].mxu0
    %v837 = vadd.f32 %v676, %v836
    %838 = vmatprep.mubr.f32.mxu0 %v361
    %839 = vmatmul.mubr.f32.gmra.mrb[0].mxu0 %v359
    %v840 = vpop.f32.mrb[0].mxu0
    %v841 = vadd.f32 %v680, %v840
    %v842 = vpop.f32.mrb[0].mxu0
    %v843 = vadd.f32 %v682, %v842
    %844 = vmatprep.mubr.f32.mxu0 %v367
    %845 = vmatmul.mubr.f32.gmra.mrb[0].mxu0 %v365
    %v846 = vpop.f32.mrb[0].mxu0
    %v847 = vadd.f32 %v686, %v846
    %v848 = vpop.f32.mrb[0].mxu0
    %v849 = vadd.f32 %v688, %v848
    %850 = vmatprep.mubr.f32.mxu0 %v373
    %851 = vmatmul.mubr.f32.gmra.mrb[0].mxu0 %v371
    %v852 = vpop.f32.mrb[0].mxu0
    %v853 = vadd.f32 %v692, %v852
    %v854 = vpop.f32.mrb[0].mxu0
    %v855 = vadd.f32 %v694, %v854
    %856 = vmatprep.mubr.f32.mxu0 %v379
    %857 = vmatmul.mubr.f32.gmra.mrb[0].mxu0 %v377
    %v858 = vpop.f32.mrb[0].mxu0
    %v859 = vadd.f32 %v698, %v858
    %v860 = vpop.f32.mrb[0].mxu0
    %v861 = vadd.f32 %v700, %v860
    %862 = vmatprep.mubr.f32.mxu0 %v385
    %863 = vmatmul.mubr.f32.gmra.mrb[0].mxu0 %v383
    %v864 = vpop.f32.mrb[0].mxu0
    %v865 = vadd.f32 %v704, %v864
    %v866 = vpop.f32.mrb[0].mxu0
    %v867 = vadd.f32 %v706, %v866
    %868 = vmatprep.mubr.f32.mxu0 %v391
    %869 = vmatmul.mubr.f32.gmra.mrb[0].mxu0 %v389
    %v870 = vpop.f32.mrb[0].mxu0
    %v871 = vadd.f32 %v710, %v870
    %v872 = vpop.f32.mrb[0].mxu0
    %v873 = vadd.f32 %v712, %v872
    %874 = vmatprep.mubr.f32.mxu0 %v397
    %875 = vmatmul.mubr.f32.gmra.mrb[0].mxu0 %v395
    %v876 = vpop.f32.mrb[0].mxu0
    %v877 = vadd.f32 %v716, %v876
    %v878 = vpop.f32.mrb[0].mxu0
    %v879 = vadd.f32 %v718, %v878
    %880 = vmatprep.mubr.f32.mxu0 %v403
    %881 = vmatmul.mubr.f32.gmra.mrb[0].mxu0 %v401
    %v882 = vpop.f32.mrb[0].mxu0
    %v883 = vadd.f32 %v722, %v882
    %v884 = vpop.f32.mrb[0].mxu0
    %v885 = vadd.f32 %v724, %v884
    %886 = vmatprep.mubr.f32.mxu0 %v409
    %887 = vmatmul.mubr.f32.gmra.mrb[0].mxu0 %v407
    %v888 = vpop.f32.mrb[0].mxu0
    %v889 = vadd.f32 %v728, %v888
    %v890 = vpop.f32.mrb[0].mxu0
    %v891 = vadd.f32 %v730, %v890
    %892 = vmatprep.mubr.f32.mxu0 %v415
    %893 = vmatmul.mubr.f32.gmra.mrb[0].mxu0 %v413
    %v894 = vpop.f32.mrb[0].mxu0
    %v895 = vadd.f32 %v734, %v894
    %v896 = vpop.f32.mrb[0].mxu0
    %v897 = vadd.f32 %v736, %v896
    %898 = vmatprep.mubr.f32.mxu0 %v421
    %899 = vmatmul.mubr.f32.gmra.mrb[0].mxu0 %v419
    %v900 = vpop.f32.mrb[0].mxu0
    %v901 = vadd.f32 %v740, %v900
    %v902 = vpop.f32.mrb[0].mxu0
    %v903 = vadd.f32 %v742, %v902
    %904 = vmatprep.mubr.f32.mxu0 %v427
    %905 = vmatmul.mubr.f32.gmra.mrb[0].mxu0 %v425
    %v906 = vpop.f32.mrb[0].mxu0
    %v907 = vadd.f32 %v746, %v906
    %v908 = vpop.f32.mrb[0].mxu0
    %v909 = vadd.f32 %v748, %v908
    %910 = vmatprep.mubr.f32.mxu0 %v433
    %911 = vmatmul.mubr.f32.gmra.mrb[0].mxu0 %v431
    %v912 = vpop.f32.mrb[0].mxu0
    %v913 = vadd.f32 %v752, %v912
    %v914 = vpop.f32.mrb[0].mxu0
    %v915 = vadd.f32 %v754, %v914
    %916 = vdwg.mxu0
    %v917 = vld [vmem:[%s10] sm:$0x3]
    %v919 = vlaneseq
    %v920 = vshrl.u32 %v919, 7
    %v921 = vsub.s32 0, %v920
    %v922 = vrot.slane %v917, %v921
    %v923 = vlaneseq
    %v924 = vshrl.u32 %v923, 7
    %v925 = vsub.s32 1, %v924
    %v926 = vrot.slane %v917, %v925
    %v929 = vadd.f32 %v823, %v922
    %v930 = vadd.f32 %v825, %v926
    %v931 = vadd.f32 %v829, %v922
    %v932 = vadd.f32 %v831, %v926
    %v933 = vadd.f32 %v835, %v922
    %v934 = vadd.f32 %v837, %v926
    %v935 = vadd.f32 %v841, %v922
    %v936 = vadd.f32 %v843, %v926
    %v937 = vadd.f32 %v847, %v922
    %v938 = vadd.f32 %v849, %v926
    %v939 = vadd.f32 %v853, %v922
    %v940 = vadd.f32 %v855, %v926
    %v941 = vadd.f32 %v859, %v922
    %v942 = vadd.f32 %v861, %v926
    %v943 = vadd.f32 %v865, %v922
    %v944 = vadd.f32 %v867, %v926
    %v945 = vadd.f32 %v871, %v922
    %v946 = vadd.f32 %v873, %v926
    %v947 = vadd.f32 %v877, %v922
    %v948 = vadd.f32 %v879, %v926
    %v949 = vadd.f32 %v883, %v922
    %v950 = vadd.f32 %v885, %v926
    %v951 = vadd.f32 %v889, %v922
    %v952 = vadd.f32 %v891, %v926
    %v953 = vadd.f32 %v895, %v922
    %v954 = vadd.f32 %v897, %v926
    %v955 = vadd.f32 %v901, %v922
    %v956 = vadd.f32 %v903, %v926
    %v957 = vadd.f32 %v907, %v922
    %v958 = vadd.f32 %v909, %v926
    %v959 = vadd.f32 %v913, %v922
    %v960 = vadd.f32 %v915, %v926
    %v961 = vxor.u32 %v929, 2147483648
    %v962 = vxor.u32 %v930, 2147483648
    %v963 = vxor.u32 %v931, 2147483648
    %v964 = vxor.u32 %v932, 2147483648
    %v965 = vxor.u32 %v933, 2147483648
    %v966 = vxor.u32 %v934, 2147483648
    %v967 = vxor.u32 %v935, 2147483648
    %v968 = vxor.u32 %v936, 2147483648
    %v969 = vxor.u32 %v937, 2147483648
    %v970 = vxor.u32 %v938, 2147483648
    %v971 = vxor.u32 %v939, 2147483648
    %v972 = vxor.u32 %v940, 2147483648
    %v973 = vxor.u32 %v941, 2147483648
    %v974 = vxor.u32 %v942, 2147483648
    %v975 = vxor.u32 %v943, 2147483648
    %v976 = vxor.u32 %v944, 2147483648
    %v977 = vxor.u32 %v945, 2147483648
    %v978 = vxor.u32 %v946, 2147483648
    %v979 = vxor.u32 %v947, 2147483648
    %v980 = vxor.u32 %v948, 2147483648
    %v981 = vxor.u32 %v949, 2147483648
    %v982 = vxor.u32 %v950, 2147483648
    %v983 = vxor.u32 %v951, 2147483648
    %v984 = vxor.u32 %v952, 2147483648
    %v985 = vxor.u32 %v953, 2147483648
    %v986 = vxor.u32 %v954, 2147483648
    %v987 = vxor.u32 %v955, 2147483648
    %v988 = vxor.u32 %v956, 2147483648
    %v989 = vxor.u32 %v957, 2147483648
    %v990 = vxor.u32 %v958, 2147483648
    %v991 = vxor.u32 %v959, 2147483648
    %v992 = vxor.u32 %v960, 2147483648
    %v993 = vmul.f32 %v961, 1.442695
    %v994 = vpow.pop %v993
    %v995 = vmul.f32 %v962, 1.442695
    %v996 = vpow.pop %v995
    %v997 = vmul.f32 %v963, 1.442695
    %v998 = vpow.pop %v997
    %v999 = vmul.f32 %v964, 1.442695
    %v1000 = vpow.pop %v999
    %v1001 = vmul.f32 %v965, 1.442695
    %v1002 = vpow.pop %v1001
    %v1003 = vmul.f32 %v966, 1.442695
    %v1004 = vpow.pop %v1003
    %v1005 = vmul.f32 %v967, 1.442695
    %v1006 = vpow.pop %v1005
    %v1007 = vmul.f32 %v968, 1.442695
    %v1008 = vpow.pop %v1007
    %v1009 = vmul.f32 %v969, 1.442695
    %v1010 = vpow.pop %v1009
    %v1011 = vmul.f32 %v970, 1.442695
    %v1012 = vpow.pop %v1011
    %v1013 = vmul.f32 %v971, 1.442695
    %v1014 = vpow.pop %v1013
    %v1015 = vmul.f32 %v972, 1.442695
    %v1016 = vpow.pop %v1015
    %v1017 = vmul.f32 %v973, 1.442695
    %v1018 = vpow.pop %v1017
    %v1019 = vmul.f32 %v974, 1.442695
    %v1020 = vpow.pop %v1019
    %v1021 = vmul.f32 %v975, 1.442695
    %v1022 = vpow.pop %v1021
    %v1023 = vmul.f32 %v976, 1.442695
    %v1024 = vpow.pop %v1023
    %v1025 = vmul.f32 %v977, 1.442695
    %v1026 = vpow.pop %v1025
    %v1027 = vmul.f32 %v978, 1.442695
    %v1028 = vpow.pop %v1027
    %v1029 = vmul.f32 %v979, 1.442695
    %v1030 = vpow.pop %v1029
    %v1031 = vmul.f32 %v980, 1.442695
    %v1032 = vpow.pop %v1031
    %v1033 = vmul.f32 %v981, 1.442695
    %v1034 = vpow.pop %v1033
    %v1035 = vmul.f32 %v982, 1.442695
    %v1036 = vpow.pop %v1035
    %v1037 = vmul.f32 %v983, 1.442695
    %v1038 = vpow.pop %v1037
    %v1039 = vmul.f32 %v984, 1.442695
    %v1040 = vpow.pop %v1039
    %v1041 = vmul.f32 %v985, 1.442695
    %v1042 = vpow.pop %v1041
    %v1043 = vmul.f32 %v986, 1.442695
    %v1044 = vpow.pop %v1043
    %v1045 = vmul.f32 %v987, 1.442695
    %v1046 = vpow.pop %v1045
    %v1047 = vmul.f32 %v988, 1.442695
    %v1048 = vpow.pop %v1047
    %v1049 = vmul.f32 %v989, 1.442695
    %v1050 = vpow.pop %v1049
    %v1051 = vmul.f32 %v990, 1.442695
    %v1052 = vpow.pop %v1051
    %v1053 = vmul.f32 %v991, 1.442695
    %v1054 = vpow.pop %v1053
    %v1055 = vmul.f32 %v992, 1.442695
    %v1056 = vpow.pop %v1055
    %v1057 = vadd.f32 %v994, 1.0
    %v1058 = vadd.f32 %v996, 1.0
    %v1059 = vadd.f32 %v998, 1.0
    %v1060 = vadd.f32 %v1000, 1.0
    %v1061 = vadd.f32 %v1002, 1.0
    %v1062 = vadd.f32 %v1004, 1.0
    %v1063 = vadd.f32 %v1006, 1.0
    %v1064 = vadd.f32 %v1008, 1.0
    %v1065 = vadd.f32 %v1010, 1.0
    %v1066 = vadd.f32 %v1012, 1.0
    %v1067 = vadd.f32 %v1014, 1.0
    %v1068 = vadd.f32 %v1016, 1.0
    %v1069 = vadd.f32 %v1018, 1.0
    %v1070 = vadd.f32 %v1020, 1.0
    %v1071 = vadd.f32 %v1022, 1.0
    %v1072 = vadd.f32 %v1024, 1.0
    %v1073 = vadd.f32 %v1026, 1.0
    %v1074 = vadd.f32 %v1028, 1.0
    %v1075 = vadd.f32 %v1030, 1.0
    %v1076 = vadd.f32 %v1032, 1.0
    %v1077 = vadd.f32 %v1034, 1.0
    %v1078 = vadd.f32 %v1036, 1.0
    %v1079 = vadd.f32 %v1038, 1.0
    %v1080 = vadd.f32 %v1040, 1.0
    %v1081 = vadd.f32 %v1042, 1.0
    %v1082 = vadd.f32 %v1044, 1.0
    %v1083 = vadd.f32 %v1046, 1.0
    %v1084 = vadd.f32 %v1048, 1.0
    %v1085 = vadd.f32 %v1050, 1.0
    %v1086 = vadd.f32 %v1052, 1.0
    %v1087 = vadd.f32 %v1054, 1.0
    %v1088 = vadd.f32 %v1056, 1.0
    %v1089 = vrcp.pop %v1057
    %v1090 = vmul.f32 1.0, %v1089
    %v1091 = vrcp.pop %v1058
    %v1092 = vmul.f32 1.0, %v1091
    %v1093 = vrcp.pop %v1059
    %v1094 = vmul.f32 1.0, %v1093
    %v1095 = vrcp.pop %v1060
    %v1096 = vmul.f32 1.0, %v1095
    %v1097 = vrcp.pop %v1061
    %v1098 = vmul.f32 1.0, %v1097
    %v1099 = vrcp.pop %v1062
    %v1100 = vmul.f32 1.0, %v1099
    %v1101 = vrcp.pop %v1063
    %v1102 = vmul.f32 1.0, %v1101
    %v1103 = vrcp.pop %v1064
    %v1104 = vmul.f32 1.0, %v1103
    %v1105 = vrcp.pop %v1065
    %v1106 = vmul.f32 1.0, %v1105
    %v1107 = vrcp.pop %v1066
    %v1108 = vmul.f32 1.0, %v1107
    %v1109 = vrcp.pop %v1067
    %v1110 = vmul.f32 1.0, %v1109
    %v1111 = vrcp.pop %v1068
    %v1112 = vmul.f32 1.0, %v1111
    %v1113 = vrcp.pop %v1069
    %v1114 = vmul.f32 1.0, %v1113
    %v1115 = vrcp.pop %v1070
    %v1116 = vmul.f32 1.0, %v1115
    %v1117 = vrcp.pop %v1071
    %v1118 = vmul.f32 1.0, %v1117
    %v1119 = vrcp.pop %v1072
    %v1120 = vmul.f32 1.0, %v1119
    %v1121 = vrcp.pop %v1073
    %v1122 = vmul.f32 1.0, %v1121
    %v1123 = vrcp.pop %v1074
    %v1124 = vmul.f32 1.0, %v1123
    %v1125 = vrcp.pop %v1075
    %v1126 = vmul.f32 1.0, %v1125
    %v1127 = vrcp.pop %v1076
    %v1128 = vmul.f32 1.0, %v1127
    %v1129 = vrcp.pop %v1077
    %v1130 = vmul.f32 1.0, %v1129
    %v1131 = vrcp.pop %v1078
    %v1132 = vmul.f32 1.0, %v1131
    %v1133 = vrcp.pop %v1079
    %v1134 = vmul.f32 1.0, %v1133
    %v1135 = vrcp.pop %v1080
    %v1136 = vmul.f32 1.0, %v1135
    %v1137 = vrcp.pop %v1081
    %v1138 = vmul.f32 1.0, %v1137
    %v1139 = vrcp.pop %v1082
    %v1140 = vmul.f32 1.0, %v1139
    %v1141 = vrcp.pop %v1083
    %v1142 = vmul.f32 1.0, %v1141
    %v1143 = vrcp.pop %v1084
    %v1144 = vmul.f32 1.0, %v1143
    %v1145 = vrcp.pop %v1085
    %v1146 = vmul.f32 1.0, %v1145
    %v1147 = vrcp.pop %v1086
    %v1148 = vmul.f32 1.0, %v1147
    %v1149 = vrcp.pop %v1087
    %v1150 = vmul.f32 1.0, %v1149
    %v1151 = vrcp.pop %v1088
    %v1152 = vmul.f32 1.0, %v1151
    %v1153 = vmul.f32 %v1090, %v341
    %v1154 = vmul.f32 %v1092, %v343
    %v1155 = vmul.f32 %v1094, %v347
    %v1156 = vmul.f32 %v1096, %v349
    %v1157 = vmul.f32 %v1098, %v353
    %v1158 = vmul.f32 %v1100, %v355
    %v1159 = vmul.f32 %v1102, %v359
    %v1160 = vmul.f32 %v1104, %v361
    %v1161 = vmul.f32 %v1106, %v365
    %v1162 = vmul.f32 %v1108, %v367
    %v1163 = vmul.f32 %v1110, %v371
    %v1164 = vmul.f32 %v1112, %v373
    %v1165 = vmul.f32 %v1114, %v377
    %v1166 = vmul.f32 %v1116, %v379
    %v1167 = vmul.f32 %v1118, %v383
    %v1168 = vmul.f32 %v1120, %v385
    %v1169 = vmul.f32 %v1122, %v389
    %v1170 = vmul.f32 %v1124, %v391
    %v1171 = vmul.f32 %v1126, %v395
    %v1172 = vmul.f32 %v1128, %v397
    %v1173 = vmul.f32 %v1130, %v401
    %v1174 = vmul.f32 %v1132, %v403
    %v1175 = vmul.f32 %v1134, %v407
    %v1176 = vmul.f32 %v1136, %v409
    %v1177 = vmul.f32 %v1138, %v413
    %v1178 = vmul.f32 %v1140, %v415
    %v1179 = vmul.f32 %v1142, %v419
    %v1180 = vmul.f32 %v1144, %v421
    %v1181 = vmul.f32 %v1146, %v425
    %v1182 = vmul.f32 %v1148, %v427
    %v1183 = vmul.f32 %v1150, %v431
    %v1184 = vmul.f32 %v1152, %v433
    %v1185 = vsub.f32 1.0, %v1090
    %v1186 = vsub.f32 1.0, %v1092
    %v1187 = vsub.f32 1.0, %v1094
    %v1188 = vsub.f32 1.0, %v1096
    %v1189 = vsub.f32 1.0, %v1098
    %v1190 = vsub.f32 1.0, %v1100
    %v1191 = vsub.f32 1.0, %v1102
    %v1192 = vsub.f32 1.0, %v1104
    %v1193 = vsub.f32 1.0, %v1106
    %v1194 = vsub.f32 1.0, %v1108
    %v1195 = vsub.f32 1.0, %v1110
    %v1196 = vsub.f32 1.0, %v1112
    %v1197 = vsub.f32 1.0, %v1114
    %v1198 = vsub.f32 1.0, %v1116
    %v1199 = vsub.f32 1.0, %v1118
    %v1200 = vsub.f32 1.0, %v1120
    %v1201 = vsub.f32 1.0, %v1122
    %v1202 = vsub.f32 1.0, %v1124
    %v1203 = vsub.f32 1.0, %v1126
    %v1204 = vsub.f32 1.0, %v1128
    %v1205 = vsub.f32 1.0, %v1130
    %v1206 = vsub.f32 1.0, %v1132
    %v1207 = vsub.f32 1.0, %v1134
    %v1208 = vsub.f32 1.0, %v1136
    %v1209 = vsub.f32 1.0, %v1138
    %v1210 = vsub.f32 1.0, %v1140
    %v1211 = vsub.f32 1.0, %v1142
    %v1212 = vsub.f32 1.0, %v1144
    %v1213 = vsub.f32 1.0, %v1146
    %v1214 = vsub.f32 1.0, %v1148
    %v1215 = vsub.f32 1.0, %v1150
    %v1216 = vsub.f32 1.0, %v1152
    %v1217 = vmul.f32 %v1185, %v435
    %v1218 = vmul.f32 %v1186, %v436
    %v1219 = vmul.f32 %v1187, %v437
    %v1220 = vmul.f32 %v1188, %v438
    %v1221 = vmul.f32 %v1189, %v439
    %v1222 = vmul.f32 %v1190, %v440
    %v1223 = vmul.f32 %v1191, %v441
    %v1224 = vmul.f32 %v1192, %v442
    %v1225 = vmul.f32 %v1193, %v443
    %v1226 = vmul.f32 %v1194, %v444
    %v1227 = vmul.f32 %v1195, %v445
    %v1228 = vmul.f32 %v1196, %v446
    %v1229 = vmul.f32 %v1197, %v447
    %v1230 = vmul.f32 %v1198, %v448
    %v1231 = vmul.f32 %v1199, %v449
    %v1232 = vmul.f32 %v1200, %v450
    %v1233 = vmul.f32 %v1201, %v451
    %v1234 = vmul.f32 %v1202, %v452
    %v1235 = vmul.f32 %v1203, %v453
    %v1236 = vmul.f32 %v1204, %v454
    %v1237 = vmul.f32 %v1205, %v455
    %v1238 = vmul.f32 %v1206, %v456
    %v1239 = vmul.f32 %v1207, %v457
    %v1240 = vmul.f32 %v1208, %v458
    %v1241 = vmul.f32 %v1209, %v459
    %v1242 = vmul.f32 %v1210, %v460
    %v1243 = vmul.f32 %v1211, %v461
    %v1244 = vmul.f32 %v1212, %v462
    %v1245 = vmul.f32 %v1213, %v463
    %v1246 = vmul.f32 %v1214, %v464
    %v1247 = vmul.f32 %v1215, %v465
    %v1248 = vmul.f32 %v1216, %v466
    %v1249 = vadd.f32 %v1153, %v1217
    %v1250 = vadd.f32 %v1154, %v1218
    %v1251 = vadd.f32 %v1155, %v1219
    %v1252 = vadd.f32 %v1156, %v1220
    %v1253 = vadd.f32 %v1157, %v1221
    %v1254 = vadd.f32 %v1158, %v1222
    %v1255 = vadd.f32 %v1159, %v1223
    %v1256 = vadd.f32 %v1160, %v1224
    %v1257 = vadd.f32 %v1161, %v1225
    %v1258 = vadd.f32 %v1162, %v1226
    %v1259 = vadd.f32 %v1163, %v1227
    %v1260 = vadd.f32 %v1164, %v1228
    %v1261 = vadd.f32 %v1165, %v1229
    %v1262 = vadd.f32 %v1166, %v1230
    %v1263 = vadd.f32 %v1167, %v1231
    %v1264 = vadd.f32 %v1168, %v1232
    %v1265 = vadd.f32 %v1169, %v1233
    %v1266 = vadd.f32 %v1170, %v1234
    %v1267 = vadd.f32 %v1171, %v1235
    %v1268 = vadd.f32 %v1172, %v1236
    %v1269 = vadd.f32 %v1173, %v1237
    %v1270 = vadd.f32 %v1174, %v1238
    %v1271 = vadd.f32 %v1175, %v1239
    %v1272 = vadd.f32 %v1176, %v1240
    %v1273 = vadd.f32 %v1177, %v1241
    %v1274 = vadd.f32 %v1178, %v1242
    %v1275 = vadd.f32 %v1179, %v1243
    %v1276 = vadd.f32 %v1180, %v1244
    %v1277 = vadd.f32 %v1181, %v1245
    %v1278 = vadd.f32 %v1182, %v1246
    %v1279 = vadd.f32 %v1183, %v1247
    %v1280 = vadd.f32 %v1184, %v1248
    loop: start=0, step=1, limit=16
    $region119: #{proto_forward.1} parent=1 // loop_pre_header
      _
    $region120: #{proto_forward.1} parent=1 // loop_header
      %s1282 = sphi 0, %s1286
      %p1283 = scmp.ge.s32.totalorder %s1282, 16
    $region121: #{proto_forward.1} parent=1 // loop_header_branch
      %1285 = sbr.rel (%p1283) target = $region125
    $region122: #{proto_forward.1} parent=1 // loop_body
      %s1287 = smul.u32 1, 1
      %s1288 = sshll.u32 %s1287, 4
      %1289 = dma.done [#allocation5], %s1288
    $region123: #{proto_forward.1} parent=1 // loop_footer
      %s1286 = sadd.s32 1, %s1282
    $region124: #{proto_forward.1} parent=1 // loop_footer_branch
      %1281 = sbr.rel target = $region120
    $region125: #{proto_forward.1} parent=1 // loop_exit
      _
    %v1290 = vld [vmem:[#allocation3] sm:$0xff]
    %v1291 = vld [vmem:[#allocation3 + $0x8] sm:$0xff]
    %v1292 = vld [vmem:[#allocation3 + $0x10] sm:$0xff]
    %v1293 = vld [vmem:[#allocation3 + $0x18] sm:$0xff]
    %1294 = vmatprep.subr.mxu0 %v1250
    %1295 = vmatpush1.xpose.msra.mxu0 %v1249
    %1296 = vmatprep.subr.mxu0 %v1252
    %1297 = vmatpush1.xpose.msra.mxu0 %v1251
    %1298 = vmatprep.subr.mxu0 %v1254
    %1299 = vmatpush1.xpose.msra.mxu0 %v1253
    %1300 = vmatprep.subr.mxu0 %v1256
    %1301 = vmatpush1.xpose.msra.mxu0 %v1255
    %1302 = vmatprep.subr.mxu0 %v1258
    %1303 = vmatpush1.xpose.msra.mxu0 %v1257
    %1304 = vmatprep.subr.mxu0 %v1260
    %1305 = vmatpush1.xpose.msra.mxu0 %v1259
    %1306 = vmatprep.subr.mxu0 %v1262
    %1307 = vmatpush1.xpose.msra.mxu0 %v1261
    %1308 = vmatprep.subr.mxu0 %v1264
    %1309 = vmatpush1.xpose.msra.mxu0 %v1263
    %1310 = vmatprep.subr.mxu0 %v1266
    %1311 = vmatpush1.xpose.msra.mxu0 %v1265
    %1312 = vmatprep.subr.mxu0 %v1268
    %1313 = vmatpush1.xpose.msra.mxu0 %v1267
    %1314 = vmatprep.subr.mxu0 %v1270
    %1315 = vmatpush1.xpose.msra.mxu0 %v1269
    %1316 = vmatprep.subr.mxu0 %v1272
    %1317 = vmatpush1.xpose.msra.mxu0 %v1271
    %1318 = vmatprep.subr.mxu0 %v1274
    %1319 = vmatpush1.xpose.msra.mxu0 %v1273
    %1320 = vmatprep.subr.mxu0 %v1276
    %1321 = vmatpush1.xpose.msra.mxu0 %v1275
    %1322 = vmatprep.subr.mxu0 %v1278
    %1323 = vmatpush1.xpose.msra.mxu0 %v1277
    %1324 = vmatprep.subr.mxu0 %v1280
    %1325 = vmatpush1.xpose.msra.mxu0 %v1279
    %1326 = vmatprep.subr.mxu0 0.0
    %1327 = vmatpush1.xpose.msra.mxu0 0.0
    %1328 = vmatprep.subr.mxu0 0.0
    %1329 = vmatpush1.xpose.msra.mxu0 0.0
    %1330 = vmatprep.subr.mxu0 0.0
    %1331 = vmatpush1.xpose.msra.mxu0 0.0
    %1332 = vmatprep.subr.mxu0 0.0
    %1333 = vmatpush1.xpose.msra.mxu0 0.0
    %1334 = vmatprep.subr.mxu0 0.0
    %1335 = vmatpush1.xpose.msra.mxu0 0.0
    %1336 = vmatprep.subr.mxu0 0.0
    %1337 = vmatpush1.xpose.msra.mxu0 0.0
    %1338 = vmatprep.subr.mxu0 0.0
    %1339 = vmatpush1.xpose.msra.mxu0 0.0
    %1340 = vmatprep.subr.mxu0 0.0
    %1341 = vmatpush1.xpose.msra.mxu0 0.0
    %1342 = vmatprep.subr.mxu0 0.0
    %1343 = vmatpush1.xpose.msra.mxu0 0.0
    %1344 = vmatprep.subr.mxu0 0.0
    %1345 = vmatpush1.xpose.msra.mxu0 0.0
    %1346 = vmatprep.subr.mxu0 0.0
    %1347 = vmatpush1.xpose.msra.mxu0 0.0
    %1348 = vmatprep.subr.mxu0 0.0
    %1349 = vmatpush1.xpose.msra.mxu0 0.0
    %1350 = vmatprep.subr.mxu0 0.0
    %1351 = vmatpush1.xpose.msra.mxu0 0.0
    %1352 = vmatprep.subr.mxu0 0.0
    %1353 = vmatpush1.xpose.msra.mxu0 0.0
    %1354 = vmatprep.subr.mxu0 0.0
    %1355 = vmatpush1.xpose.msra.mxu0 0.0
    %1356 = vmatprep.subr.mxu0 0.0
    %1357 = vmatpush1.xpose.msra.mxu0 0.0
    %1358 = vmatprep.mubr.f32.mxu0 %v1291
    %1359 = vmatmul.mubr.f32.gmra.mrb[0].mxu0 %v1290
    %v1360 = vpop.f32.mrb[0].mxu0
    %v1361 = vadd.f32 0.0, %v1360
    %v1362 = vpop.f32.mrb[0].mxu0
    %1363 = vmatprep.mubr.f32.mxu0 %v1293
    %1364 = vmatmul.mubr.f32.gmra.mrb[0].mxu0 %v1292
    %v1365 = vpop.f32.mrb[0].mxu0
    %v1366 = vadd.f32 0.0, %v1365
    %v1367 = vpop.f32.mrb[0].mxu0
    %1368 = vdwg.mxu0
    %v1369 = vmul.f32 %v1290, %v1290
    %v1370 = vmul.f32 %v1291, %v1291
    %v1371 = vmul.f32 %v1292, %v1292
    %v1372 = vmul.f32 %v1293, %v1293
    %v1373 = vmul.f32 %v1290, 2e-06
    %v1374 = vmul.f32 %v1291, 2e-06
    %v1375 = vmul.f32 %v1292, 2e-06
    %v1376 = vmul.f32 %v1293, 2e-06
    %v1377 = vadd.f32 %v1369, %v1373
    %v1378 = vadd.f32 %v1370, %v1374
    %v1379 = vadd.f32 %v1371, %v1375
    %v1380 = vadd.f32 %v1372, %v1376
    %v1381 = vadd.f32 %v1377, %v1378
    %1382 = vadd.xlane.f32.xlu0 %v1381
    %v1383 = vpop.xlane.xlu0 %1382
    %v1384 = vadd.f32 %v1379, %v1380
    %1385 = vadd.xlane.f32.xlu0 %v1384
    %v1386 = vpop.xlane.xlu0 %1385
    %v1387 = vmul.f32 %v1249, %v1249
    %v1388 = vmul.f32 %v1250, %v1250
    %v1389 = vmul.f32 %v1251, %v1251
    %v1390 = vmul.f32 %v1252, %v1252
    %v1391 = vmul.f32 %v1253, %v1253
    %v1392 = vmul.f32 %v1254, %v1254
    %v1393 = vmul.f32 %v1255, %v1255
    %v1394 = vmul.f32 %v1256, %v1256
    %v1395 = vmul.f32 %v1257, %v1257
    %v1396 = vmul.f32 %v1258, %v1258
    %v1397 = vmul.f32 %v1259, %v1259
    %v1398 = vmul.f32 %v1260, %v1260
    %v1399 = vmul.f32 %v1261, %v1261
    %v1400 = vmul.f32 %v1262, %v1262
    %v1401 = vmul.f32 %v1263, %v1263
    %v1402 = vmul.f32 %v1264, %v1264
    %v1403 = vmul.f32 %v1265, %v1265
    %v1404 = vmul.f32 %v1266, %v1266
    %v1405 = vmul.f32 %v1267, %v1267
    %v1406 = vmul.f32 %v1268, %v1268
    %v1407 = vmul.f32 %v1269, %v1269
    %v1408 = vmul.f32 %v1270, %v1270
    %v1409 = vmul.f32 %v1271, %v1271
    %v1410 = vmul.f32 %v1272, %v1272
    %v1411 = vmul.f32 %v1273, %v1273
    %v1412 = vmul.f32 %v1274, %v1274
    %v1413 = vmul.f32 %v1275, %v1275
    %v1414 = vmul.f32 %v1276, %v1276
    %v1415 = vmul.f32 %v1277, %v1277
    %v1416 = vmul.f32 %v1278, %v1278
    %v1417 = vmul.f32 %v1279, %v1279
    %v1418 = vmul.f32 %v1280, %v1280
    %v1419 = vmul.f32 %v1249, 2e-06
    %v1420 = vmul.f32 %v1250, 2e-06
    %v1421 = vmul.f32 %v1251, 2e-06
    %v1422 = vmul.f32 %v1252, 2e-06
    %v1423 = vmul.f32 %v1253, 2e-06
    %v1424 = vmul.f32 %v1254, 2e-06
    %v1425 = vmul.f32 %v1255, 2e-06
    %v1426 = vmul.f32 %v1256, 2e-06
    %v1427 = vmul.f32 %v1257, 2e-06
    %v1428 = vmul.f32 %v1258, 2e-06
    %v1429 = vmul.f32 %v1259, 2e-06
    %v1430 = vmul.f32 %v1260, 2e-06
    %v1431 = vmul.f32 %v1261, 2e-06
    %v1432 = vmul.f32 %v1262, 2e-06
    %v1433 = vmul.f32 %v1263, 2e-06
    %v1434 = vmul.f32 %v1264, 2e-06
    %v1435 = vmul.f32 %v1265, 2e-06
    %v1436 = vmul.f32 %v1266, 2e-06
    %v1437 = vmul.f32 %v1267, 2e-06
    %v1438 = vmul.f32 %v1268, 2e-06
    %v1439 = vmul.f32 %v1269, 2e-06
    %v1440 = vmul.f32 %v1270, 2e-06
    %v1441 = vmul.f32 %v1271, 2e-06
    %v1442 = vmul.f32 %v1272, 2e-06
    %v1443 = vmul.f32 %v1273, 2e-06
    %v1444 = vmul.f32 %v1274, 2e-06
    %v1445 = vmul.f32 %v1275, 2e-06
    %v1446 = vmul.f32 %v1276, 2e-06
    %v1447 = vmul.f32 %v1277, 2e-06
    %v1448 = vmul.f32 %v1278, 2e-06
    %v1449 = vmul.f32 %v1279, 2e-06
    %v1450 = vmul.f32 %v1280, 2e-06
    %v1451 = vsub.f32 %v1387, %v1419
    %v1452 = vsub.f32 %v1388, %v1420
    %v1453 = vsub.f32 %v1389, %v1421
    %v1454 = vsub.f32 %v1390, %v1422
    %v1455 = vsub.f32 %v1391, %v1423
    %v1456 = vsub.f32 %v1392, %v1424
    %v1457 = vsub.f32 %v1393, %v1425
    %v1458 = vsub.f32 %v1394, %v1426
    %v1459 = vsub.f32 %v1395, %v1427
    %v1460 = vsub.f32 %v1396, %v1428
    %v1461 = vsub.f32 %v1397, %v1429
    %v1462 = vsub.f32 %v1398, %v1430
    %v1463 = vsub.f32 %v1399, %v1431
    %v1464 = vsub.f32 %v1400, %v1432
    %v1465 = vsub.f32 %v1401, %v1433
    %v1466 = vsub.f32 %v1402, %v1434
    %v1467 = vsub.f32 %v1403, %v1435
    %v1468 = vsub.f32 %v1404, %v1436
    %v1469 = vsub.f32 %v1405, %v1437
    %v1470 = vsub.f32 %v1406, %v1438
    %v1471 = vsub.f32 %v1407, %v1439
    %v1472 = vsub.f32 %v1408, %v1440
    %v1473 = vsub.f32 %v1409, %v1441
    %v1474 = vsub.f32 %v1410, %v1442
    %v1475 = vsub.f32 %v1411, %v1443
    %v1476 = vsub.f32 %v1412, %v1444
    %v1477 = vsub.f32 %v1413, %v1445
    %v1478 = vsub.f32 %v1414, %v1446
    %v1479 = vsub.f32 %v1415, %v1447
    %v1480 = vsub.f32 %v1416, %v1448
    %v1481 = vsub.f32 %v1417, %v1449
    %v1482 = vsub.f32 %v1418, %v1450
    %1483 = vmatprep.subr.mxu0 %v1452
    %1484 = vmatpush1.xpose.msra.mxu0 %v1451
    %1485 = vmatprep.subr.mxu0 %v1454
    %1486 = vmatpush1.xpose.msra.mxu0 %v1453
    %1487 = vmatprep.subr.mxu0 %v1456
    %1488 = vmatpush1.xpose.msra.mxu0 %v1455
    %1489 = vmatprep.subr.mxu0 %v1458
    %1490 = vmatpush1.xpose.msra.mxu0 %v1457
    %1491 = vmatprep.subr.mxu0 %v1460
    %1492 = vmatpush1.xpose.msra.mxu0 %v1459
    %1493 = vmatprep.subr.mxu0 %v1462
    %1494 = vmatpush1.xpose.msra.mxu0 %v1461
    %1495 = vmatprep.subr.mxu0 %v1464
    %1496 = vmatpush1.xpose.msra.mxu0 %v1463
    %1497 = vmatprep.subr.mxu0 %v1466
    %1498 = vmatpush1.xpose.msra.mxu0 %v1465
    %1499 = vmatprep.subr.mxu0 %v1468
    %1500 = vmatpush1.xpose.msra.mxu0 %v1467
    %1501 = vmatprep.subr.mxu0 %v1470
    %1502 = vmatpush1.xpose.msra.mxu0 %v1469
    %1503 = vmatprep.subr.mxu0 %v1472
    %1504 = vmatpush1.xpose.msra.mxu0 %v1471
    %1505 = vmatprep.subr.mxu0 %v1474
    %1506 = vmatpush1.xpose.msra.mxu0 %v1473
    %1507 = vmatprep.subr.mxu0 %v1476
    %1508 = vmatpush1.xpose.msra.mxu0 %v1475
    %1509 = vmatprep.subr.mxu0 %v1478
    %1510 = vmatpush1.xpose.msra.mxu0 %v1477
    %1511 = vmatprep.subr.mxu0 %v1480
    %1512 = vmatpush1.xpose.msra.mxu0 %v1479
    %1513 = vmatprep.subr.mxu0 %v1482
    %1514 = vmatpush1.xpose.msra.mxu0 %v1481
    %1515 = vmatprep.subr.mxu0 0.0
    %1516 = vmatpush1.xpose.msra.mxu0 0.0
    %1517 = vmatprep.subr.mxu0 0.0
    %1518 = vmatpush1.xpose.msra.mxu0 0.0
    %1519 = vmatprep.subr.mxu0 0.0
    %1520 = vmatpush1.xpose.msra.mxu0 0.0
    %1521 = vmatprep.subr.mxu0 0.0
    %1522 = vmatpush1.xpose.msra.mxu0 0.0
    %1523 = vmatprep.subr.mxu0 0.0
    %1524 = vmatpush1.xpose.msra.mxu0 0.0
    %1525 = vmatprep.subr.mxu0 0.0
    %1526 = vmatpush1.xpose.msra.mxu0 0.0
    %1527 = vmatprep.subr.mxu0 0.0
    %1528 = vmatpush1.xpose.msra.mxu0 0.0
    %1529 = vmatprep.subr.mxu0 0.0
    %1530 = vmatpush1.xpose.msra.mxu0 0.0
    %1531 = vmatprep.subr.mxu0 0.0
    %1532 = vmatpush1.xpose.msra.mxu0 0.0
    %1533 = vmatprep.subr.mxu0 0.0
    %1534 = vmatpush1.xpose.msra.mxu0 0.0
    %1535 = vmatprep.subr.mxu0 0.0
    %1536 = vmatpush1.xpose.msra.mxu0 0.0
    %1537 = vmatprep.subr.mxu0 0.0
    %1538 = vmatpush1.xpose.msra.mxu0 0.0
    %1539 = vmatprep.subr.mxu0 0.0
    %1540 = vmatpush1.xpose.msra.mxu0 0.0
    %1541 = vmatprep.subr.mxu0 0.0
    %1542 = vmatpush1.xpose.msra.mxu0 0.0
    %1543 = vmatprep.subr.mxu0 0.0
    %1544 = vmatpush1.xpose.msra.mxu0 0.0
    %1545 = vmatprep.subr.mxu0 0.0
    %1546 = vmatpush1.xpose.msra.mxu0 0.0
    %1547 = vmatprep.mubr.f32.mxu0 1.0
    %1548 = vmatmul.mubr.f32.gmra.mrb[0].mxu0 1.0
    %v1549 = vpop.f32.mrb[0].mxu0
    %v1550 = vadd.f32 0.0, %v1549
    %v1551 = vpop.f32.mrb[0].mxu0
    %1552 = vdwg.mxu0
    %v1553 = vlaneseq
    %v1554 = vshrl.u32 %v1553, 7
    %v1555 = vsub.s32 0, %v1554
    %v1556 = vrot.slane %v1550, %v1555
    %v1557 = vadd.f32 %v1383, %v1556
    %v1558 = vadd.f32 %v1386, %v1556
    %v1559 = vmul.f32 %v1361, 2.0
    %v1560 = vmul.f32 %v1366, 2.0
    %v1561 = vsub.f32 %v1557, %v1559
    %v1562 = vsub.f32 %v1558, %v1560
    %v1563 = vadd.f32 %v1561, 2.56e-10
    %v1564 = vadd.f32 %v1562, 2.56e-10
    %v1565 = vmax.f32 %v1563, 0.0
    %v1566 = vmax.f32 %v1564, 0.0
    %v1567 = vrsqrt.pop %v1565
    %v1568 = vmul.f32 %v1565, %v1567
    %vm1569 = vcmp.eq.f32.partialorder %v1565, inf
    %v1570 = vsel %vm1569, %v1565, %v1568
    %vm1571 = vcmp.eq.f32.partialorder %v1565, 0.0
    %v1572 = vand.u32 %v1565, 2147483648
    %v1573 = vsel %vm1571, %v1572, %v1570
    %v1574 = vrsqrt.pop %v1566
    %v1575 = vmul.f32 %v1566, %v1574
    %vm1576 = vcmp.eq.f32.partialorder %v1566, inf
    %v1577 = vsel %vm1576, %v1566, %v1575
    %vm1578 = vcmp.eq.f32.partialorder %v1566, 0.0
    %v1579 = vand.u32 %v1566, 2147483648
    %v1580 = vsel %vm1578, %v1579, %v1577
    %v1581 = vsub.f32 0.0, %v1573
    %v1582 = vsub.f32 0.0, %v1580
    %1583 = vst [vmem:[%s11] sm:$0xff] %v1581
    %1584 = vst [vmem:[%s11 + $0x8] sm:$0xff] %v1582
    // Predicated region
    $region126: #{proto_forward.1} parent=1 // pred_check
      _
    $region127: #{proto_forward.1} parent=1 // pred_check_branch
      %1586 = sbr.rel (0) target = $region129
    $region128: #{proto_forward.1} parent=1 // pred_region
      _
    $region129: #{proto_forward.1} parent=1 // pred_fallthru
      _
    // Predicated region
    $region130: #{proto_forward.1} parent=1 // pred_check
      _
    $region131: #{proto_forward.1} parent=1 // pred_check_branch
      %1588 = sbr.rel (0) target = $region133
    $region132: #{proto_forward.1} parent=1 // pred_region
      _
    $region133: #{proto_forward.1} parent=1 // pred_fallthru
      _
    %1589 = vsyncpa [#allocation10], 1
    %1590 = vsyncpa [#allocation12], 1
  %1591 = vsyncmov [#allocation4]
  %s1592 = vpop.sfrf %1591
  %p1593 = scmp.eq.s32.totalorder %s1592, 0
  %p1594 = pneg %p1593
  %1596 = shalt.err (%p1594)
  %1597 = vsyncmov [#allocation5]
  %s1598 = vpop.sfrf %1597
  %p1599 = scmp.eq.s32.totalorder %s1598, 0
  %p1600 = pneg %p1599
  %1602 = shalt.err (%p1600)

</llo_original>
